<compile_context>
chip_gen: v6e
topology: v6e:2x2x1
jax: 0.10.0
libtpu: 0.0.40
codegen_flags: <defaults>
</compile_context>

<pallas_src>
import jax
import jax.numpy as jnp
from jax.experimental import pallas as pl
from jax.experimental.pallas import tpu as pltpu

D_IN = 1664    # from nn.Parameter(torch.randn(1664, 1280))
D_OUT = 1280


def _proj_matmul_kernel(xm_ref, w_ref, o_ref):
    # xm_ref: (B, D_IN)  token-mean, resident in VMEM across the whole grid
    # w_ref:  (D_IN, TN) one output-feature slab of proj (streamed per step)
    # o_ref:  (B, TN)    output tile
    o_ref[...] = jnp.dot(
        xm_ref[...], w_ref[...], preferred_element_type=jnp.float32
    ).astype(o_ref.dtype)


def clip_proj(x, proj, *, tn=640, stream_weights_bf16=False):
    """x: (B, S, D_IN), proj: (D_IN, D_OUT) -> (B, D_OUT)."""
    B, S, K = x.shape
    Kw, N = proj.shape
    assert K == Kw, f"feature-dim mismatch: {K} vs {Kw}"
    tn = min(tn, N)
    assert N % tn == 0, f"D_OUT={N} must be divisible by tn={tn}"
    assert tn % 128 == 0, f"tn={tn} must be a multiple of 128"

    # Hoisted token mean: computed once, not re-done per output-feature tile.
    x_mean = jnp.mean(x.astype(jnp.float32), axis=1)          # (B, D_IN) f32

    # Optional bf16 weight streaming to halve the HBM roofline (MXU-native).
    w = proj.astype(jnp.bfloat16) if stream_weights_bf16 else proj

    return pl.pallas_call(
        _proj_matmul_kernel,
        out_shape=jax.ShapeDtypeStruct((B, N), x.dtype),
        grid_spec=pl.GridSpec(
            grid=(N // tn,),
            in_specs=[
                # resident (B, D_IN) mean -- constant block index, loaded once
                pl.BlockSpec((B, K), lambda j: (0, 0)),
                # j-th 640-wide column slab of the projection matrix
                pl.BlockSpec((K, tn), lambda j: (0, j)),
            ],
            out_specs=pl.BlockSpec((B, tn), lambda j: (0, j)),
        ),
        compiler_params=pltpu.CompilerParams(
            dimension_semantics=("parallel",),
        ),
    )(x_mean, w)


if __name__ == "__main__":
    key = jax.random.PRNGKey(0)
    k_x, k_w = jax.random.split(key)

    # small input consistent with the forward: (batch=2, tokens=8, features=1664)
    B, S = 2, 8
    x = jax.random.normal(k_x, (B, S, D_IN), dtype=jnp.float32)
    proj = jax.random.normal(k_w, (D_IN, D_OUT), dtype=jnp.float32)

    out = jax.block_until_ready(clip_proj(x, proj))

    # pure-JAX reference check
    ref = jnp.mean(x, axis=1) @ proj
    assert out.shape == (B, D_OUT)
    assert jnp.allclose(out, ref, atol=1e-3, rtol=1e-3)

    print("KERNEL_OK")
</pallas_src>

<mosaic_0001>
module attributes {stable_mosaic.version = 11 : i64} {
  func.func @_proj_matmul_kernel(%arg0: i32, %arg1: memref<2x1664xf32, #tpu.memory_space<vmem>>, %arg2: memref<1664x640xf32, #tpu.memory_space<vmem>>, %arg3: memref<2x640xf32, #tpu.memory_space<vmem>>) attributes {dimension_semantics = [#tpu.dimension_semantics<parallel>], iteration_bounds = array<i64: 2>, scalar_prefetch = 0 : i64, scratch_operands = 0 : i64, tpu.core_type = #tpu.core_type<tc>, window_params = [{pipeline_mode = #tpu.pipeline_mode<synchronous>, transform_indices = @transform_0, window_bounds = array<i64: 2, 1664>}, {transform_indices = @transform_1, window_bounds = array<i64: 1664, 640>}, {transform_indices = @transform_2, window_bounds = array<i64: 2, 640>}]} {
    %c0 = arith.constant 0 : index
    %c0_0 = arith.constant 0 : index
    %0 = vector.load %arg1[%c0, %c0_0] : memref<2x1664xf32, #tpu.memory_space<vmem>>, vector<2x1664xf32>
    %c0_1 = arith.constant 0 : index
    %c0_2 = arith.constant 0 : index
    %1 = vector.load %arg2[%c0_1, %c0_2] : memref<1664x640xf32, #tpu.memory_space<vmem>>, vector<1664x640xf32>
    %cst = arith.constant dense<0.000000e+00> : vector<2x640xf32>
    %2 = tpu.matmul %0, %1, %cst {dimension_numbers = #tpu.dot_dimension_numbers<[1], [0], [0], [1], [0, 0, 1, 1], [], []>} : vector<2x1664xf32>, vector<1664x640xf32>, vector<2x640xf32> -> vector<2x640xf32>
    %c0_3 = arith.constant 0 : index
    %c0_4 = arith.constant 0 : index
    %3 = vector.load %arg3[%c0_3, %c0_4] : memref<2x640xf32, #tpu.memory_space<vmem>>, vector<2x640xf32>
    tpu.vector_store %arg3[%c0_3, %c0_4], %2 {strides = array<i32>} : memref<2x640xf32, #tpu.memory_space<vmem>>, vector<2x640xf32>,
    return
  }
  func.func @transform_0(%arg0: i32) -> (i32, i32) {
    %c0_i32 = arith.constant 0 : i32
    %c0_i32_0 = arith.constant 0 : i32
    %c0_i32_1 = arith.constant 0 : i32
    return %c0_i32, %c0_i32_0 : i32, i32
  }
  func.func @transform_1(%arg0: i32) -> (i32, i32) {
    %c0_i32 = arith.constant 0 : i32
    %c0_i32_0 = arith.constant 0 : i32
    return %c0_i32, %arg0 : i32, i32
  }
  func.func @transform_2(%arg0: i32) -> (i32, i32) {
    %c0_i32 = arith.constant 0 : i32
    %c0_i32_0 = arith.constant 0 : i32
    return %c0_i32, %arg0 : i32, i32
  }
}

</mosaic_0001>

<llo_original>
// kernel: tpu_custom_call.1
$region0: #{tpu_custom_call.1}
  #allocation0 [shape = 'u32[]', space=smem, size = 0x4, offset = 0x4, fixed_abs, tag = 'smem constant byte address 0x4 - core index']
  #allocation1 [shape = 'u32[144,128]{1,0:T(1,128)}', space=vmem, size = 0x12000, scoped, tag = 'internal scratch']
  %s0 = inlined_call_operand.hbm [shape: f32[2,1664], index: 0, kind: input, shape index: {}]
  %s1 = inlined_call_operand.hbm [shape: f32[1664,1280], index: 1, kind: input, shape index: {}]
  %s2 = inlined_call_operand.hbm [shape: f32[2,1280], index: 2, kind: output, shape index: {}]
  %s3 = sld [smem:[#allocation0]]
  $region49: #{tpu_custom_call.1} parent=0
    _
  %s5 = ssub.s32 1, %s3
  %s6 = scalar_select 0, %s5, %s3
  $region1: #{tpu_custom_call.1} parent=0
    #allocation2 [shape = 'u8[13312]{0}', space=vmem, size = 0x3400, scoped, tag = 'input window, operand 0, single buffered']
    #allocation3 [shape = 's32[2]{0}', space=sflag, size = 0x8, scoped, tag = 'scoped memory for tpu_custom_call.1']
    #allocation4 [shape = 's32[2]{0}', space=sflag, size = 0x8, scoped, tag = 'scoped memory for tpu_custom_call.1']
    #allocation5 [shape = 'u8[8519680]{0}', space=vmem, size = 0x820000, scoped, tag = 'input window, operand 1']
    #allocation6 [shape = 's32[2]{0}', space=sflag, size = 0x8, scoped, tag = 'scoped memory for tpu_custom_call.1']
    #allocation7 [shape = 'u8[10240]{0}', space=vmem, size = 0x2800, scoped, tag = 'output window, operand 0']
    %7 = vsyncpa [#allocation3], 0
    %8 = vsyncpa [#allocation6], 0
    %s9 = scalar_lea.sflag [#allocation6], 1
    %10 = vsyncpa %s9, 0
    %11 = vsyncpa [#allocation4], 0
    %s12 = scalar_lea.sflag [#allocation4], 1
    %13 = vsyncpa %s12, 0
    loop: start=0, step=1, limit=4
    $region2: #{tpu_custom_call.1} parent=1 // loop_pre_header
      _
    $region3: #{tpu_custom_call.1} parent=1 // loop_header
      %s15 = sphi 0, %s19
      %p16 = scmp.ge.s32.totalorder %s15, 4
      %s23 = sphi 0, %s23
      %s25 = sphi 0, %s23
      %s26 = sphi 0, %s25
      %s40 = sphi 0, %s26
      %s46 = sphi 0, %s48
      %s49 = sphi 0, %s46
      %s50 = sphi 0, %s49
      %s66 = sphi 0, %s50
      %s72 = sphi 0, %s74
      %s75 = sphi 0, %s72
      %s76 = sphi 0, %s75
      %s92 = sphi 0, %s76
    $region4: #{tpu_custom_call.1} parent=1 // loop_header_branch
      %18 = sbr.rel (%p16) target = $region8
    $region5: #{tpu_custom_call.1} parent=1 // loop_body
      %s20 = ssub.s32 %s15, 1
      %s21 = ssub.s32 %s15, 2
      %s22 = sadd.s32 %s15, 1
      %s24 = sadd.s32 %s23, 1
      %p27 = scmp.eq.s32.totalorder %s15, 1
      %p28 = scmp.ne.s32.totalorder %s23, %s25
      %p29 = scmp.eq.s32.totalorder %s15, 0
      %p30 = por %p28, %p29
      %p31 = scmp.ne.s32.totalorder %s23, %s25
      %p32 = scmp.eq.s32.totalorder %s20, 1
      %p33 = por %p31, %p32
      %p34 = scmp.ne.s32.totalorder %s25, %s26
      %p35 = scmp.eq.s32.totalorder %s20, 0
      %p36 = por %p34, %p35
      %p37 = scmp.ne.s32.totalorder %s25, %s26
      %p38 = scmp.eq.s32.totalorder %s21, 1
      %p39 = por %p37, %p38
      %p41 = scmp.ne.s32.totalorder %s26, %s40
      %p42 = scmp.eq.s32.totalorder %s21, 0
      %p43 = por %p41, %p42
      %s44 = ssub.s32 %s15, %s22
      %p45 = scmp.eq.s32.totalorder %s44, 0
      %s47 = sadd.s32 %s46, 1
      %s48 = scalar_select %p45, %s46, %s47
      %p51 = pneg %p45
      %p52 = scmp.eq.s32.totalorder %s15, 1
      %p53 = por %p51, %p52
      %p54 = scmp.ne.s32.totalorder %s46, %s49
      %p55 = scmp.eq.s32.totalorder %s15, 0
      %p56 = por %p54, %p55
      %p57 = scmp.ne.s32.totalorder %s46, %s49
      %p58 = scmp.eq.s32.totalorder %s20, 1
      %p59 = por %p57, %p58
      %p60 = scmp.ne.s32.totalorder %s49, %s50
      %p61 = scmp.eq.s32.totalorder %s20, 0
      %p62 = por %p60, %p61
      %p63 = scmp.ne.s32.totalorder %s49, %s50
      %p64 = scmp.eq.s32.totalorder %s21, 1
      %p65 = por %p63, %p64
      %p67 = scmp.ne.s32.totalorder %s50, %s66
      %p68 = scmp.eq.s32.totalorder %s21, 0
      %p69 = por %p67, %p68
      %s70 = ssub.s32 %s15, %s22
      %p71 = scmp.eq.s32.totalorder %s70, 0
      %s73 = sadd.s32 %s72, 1
      %s74 = scalar_select %p71, %s72, %s73
      %p77 = pneg %p71
      %p78 = scmp.eq.s32.totalorder %s15, 1
      %p79 = por %p77, %p78
      %p80 = scmp.ne.s32.totalorder %s72, %s75
      %p81 = scmp.eq.s32.totalorder %s15, 0
      %p82 = por %p80, %p81
      %p83 = scmp.ne.s32.totalorder %s72, %s75
      %p84 = scmp.eq.s32.totalorder %s20, 1
      %p85 = por %p83, %p84
      %p86 = scmp.ne.s32.totalorder %s75, %s76
      %p87 = scmp.eq.s32.totalorder %s20, 0
      %p88 = por %p86, %p87
      %p89 = scmp.ne.s32.totalorder %s75, %s76
      %p90 = scmp.eq.s32.totalorder %s21, 1
      %p91 = por %p89, %p90
      %p93 = scmp.ne.s32.totalorder %s76, %s92
      %p94 = scmp.eq.s32.totalorder %s21, 0
      %p95 = por %p93, %p94
      %p96 = scmp.le.s32.totalorder 1, %s15
      %p97 = scmp.lt.s32.totalorder %s15, 3
      %p98 = pnand %p96, %p97
      %p99 = pneg %p98
      // Predicated region
      $region9: #{tpu_custom_call.1} parent=5 // pred_check
        _
      $region10: #{tpu_custom_call.1} parent=5 // pred_check_branch
        %101 = sbr.rel (%p98) target = $region12
      $region11: #{tpu_custom_call.1} parent=5 // pred_region
        %s102 = ssub.s32 %s15, 1
        // Predicated region
        $region13: #{tpu_custom_call.1} parent=11 // pred_check
          %p103 = pneg %p36
        $region14: #{tpu_custom_call.1} parent=11 // pred_check_branch
          %105 = sbr.rel (%p103) target = $region16
        $region15: #{tpu_custom_call.1} parent=11 // pred_region
          %s107 = ssub.s32 416, 416
          %108 = vsyncadd [#allocation3], %s107
          %s110 = sshll.u32 [#allocation2], 4
          %s111 = int_to_ptr.vmem [resolvable:$true] %s110
          %113 = dma.hbm_to_vmem [thread:$0]  %s0, 416, %s111, [#allocation3]
        $region16: #{tpu_custom_call.1} parent=11 // pred_fallthru
          _
      $region12: #{tpu_custom_call.1} parent=5 // pred_fallthru
        _
      %p114 = scmp.lt.s32.totalorder %s15, 2
      // Predicated region
      $region17: #{tpu_custom_call.1} parent=5 // pred_check
        %p115 = pneg %p114
      $region18: #{tpu_custom_call.1} parent=5 // pred_check_branch
        %117 = sbr.rel (%p115) target = $region20
      $region19: #{tpu_custom_call.1} parent=5 // pred_region
        // Predicated region
        $region21: #{tpu_custom_call.1} parent=19 // pred_check
          %p118 = pneg %p56
        $region22: #{tpu_custom_call.1} parent=19 // pred_check_branch
          %120 = sbr.rel (%p118) target = $region24
        $region23: #{tpu_custom_call.1} parent=19 // pred_region
          %s121 = sand.u32 %s46, 1
          %s122 = scalar_lea.sflag [#allocation6], %s121
          %s123 = sand.u32 %s46, 1
          %s124 = smul.addr %s123, 8320
          %s125 = scalar_lea.vmem [#allocation5], %s124
          %s126 = smul.u32 5, %s15
          %s128 = ssub.s32 133120, 133120
          %129 = vsyncadd %s122, %s128
          %s130 = smul.addr %s126, 128
          %s131 = scalar_lea.hbm %s1, %s130
          %s132 = sshll.u32 %s125, 4
          %s133 = int_to_ptr.vmem [resolvable:$true] %s132
          %138 = dma.hbm_to_vmem [thread:$0]  %s131, 133120, %s133, %s122, 1280, 640, 40
        $region24: #{tpu_custom_call.1} parent=19 // pred_fallthru
          _
      $region20: #{tpu_custom_call.1} parent=5 // pred_fallthru
        _
      %p139 = scmp.le.s32.totalorder 1, %s15
      %p140 = scmp.lt.s32.totalorder %s15, 3
      %p141 = pnand %p139, %p140
      %p142 = pneg %p141
      // Predicated region
      $region25: #{tpu_custom_call.1} parent=5 // pred_check
        _
      $region26: #{tpu_custom_call.1} parent=5 // pred_check_branch
        %144 = sbr.rel (%p141) target = $region28
      $region27: #{tpu_custom_call.1} parent=5 // pred_region
        %s145 = ssub.s32 %s15, 1
        // Predicated region
        $region29: #{tpu_custom_call.1} parent=27 // pred_check
          %p146 = pneg %p36
        $region30: #{tpu_custom_call.1} parent=27 // pred_check_branch
          %148 = sbr.rel (%p146) target = $region32
        $region31: #{tpu_custom_call.1} parent=27 // pred_region
          %149 = dma.done [#allocation3], 416
        $region32: #{tpu_custom_call.1} parent=27 // pred_fallthru
          _
        %s150 = sand.u32 %s49, 1
        %s151 = scalar_lea.sflag [#allocation6], %s150
        %s152 = sand.u32 %s49, 1
        %s153 = smul.addr %s152, 8320
        %s154 = scalar_lea.vmem [#allocation5], %s153
        // Predicated region
        $region33: #{tpu_custom_call.1} parent=27 // pred_check
          %p155 = pneg %p62
        $region34: #{tpu_custom_call.1} parent=27 // pred_check_branch
          %157 = sbr.rel (%p155) target = $region36
        $region35: #{tpu_custom_call.1} parent=27 // pred_region
          %158 = dma.done %s151, 133120
        $region36: #{tpu_custom_call.1} parent=27 // pred_fallthru
          _
        %p159 = pneg %p36
        %p160 = pneg %p33
        %s161 = sand.u32 %s49, 1
        %s162 = scalar_lea.sflag [#allocation6], %s161
        %s163 = sand.u32 %s49, 1
        %s164 = smul.addr %s163, 8320
        %s165 = scalar_lea.vmem [#allocation5], %s164
        %p166 = pneg %p62
        %p167 = pneg %p59
        %p168 = pneg %p88
        %p169 = pneg %p85
        %s170 = sand.u32 %s75, 1
        %s171 = scalar_lea.sflag [#allocation4], %s170
        %s172 = sand.u32 %s75, 1
        %s173 = smul.addr %s172, 10
        %s174 = scalar_lea.vmem [#allocation7], %s173
        %s175 = smul.u32 5, %s20
        %s176 = smul.u32 5, %s20
        %v177 = vld [vmem:[#allocation2] sm:$0xff]
        %v178 = vld [vmem:[#allocation2 + $0x8] sm:$0xff]
        %v179 = vld [vmem:[#allocation2 + $0x10] sm:$0xff]
        %v180 = vld [vmem:[#allocation2 + $0x18] sm:$0x3]
        %v181 = vld [vmem:[%s154] sm:$0xff]
        %v182 = vld [vmem:[%s154 + $0x8] sm:$0xff]
        %v183 = vld [vmem:[%s154 + $0x10] sm:$0xff]
        %v184 = vld [vmem:[%s154 + $0x18] sm:$0xff]
        %v185 = vld [vmem:[%s154 + $0x20] sm:$0xff]
        %v186 = vld [vmem:[%s154 + $0x28] sm:$0xff]
        %v187 = vld [vmem:[%s154 + $0x30] sm:$0xff]
        %v188 = vld [vmem:[%s154 + $0x38] sm:$0xff]
        %v189 = vld [vmem:[%s154 + $0x40] sm:$0xff]
        %v190 = vld [vmem:[%s154 + $0x48] sm:$0xff]
        %v191 = vld [vmem:[%s154 + $0x50] sm:$0xff]
        %v192 = vld [vmem:[%s154 + $0x58] sm:$0xff]
        %v193 = vld [vmem:[%s154 + $0x60] sm:$0xff]
        %v194 = vld [vmem:[%s154 + $0x68] sm:$0xff]
        %v195 = vld [vmem:[%s154 + $0x70] sm:$0xff]
        %v196 = vld [vmem:[%s154 + $0x78] sm:$0xff]
        %v197 = vld [vmem:[%s154 + $0x80] sm:$0xff]
        %v198 = vld [vmem:[%s154 + $0x88] sm:$0xff]
        %v199 = vld [vmem:[%s154 + $0x90] sm:$0xff]
        %v200 = vld [vmem:[%s154 + $0x98] sm:$0xff]
        %v201 = vld [vmem:[%s154 + $0xa0] sm:$0xff]
        %v202 = vld [vmem:[%s154 + $0xa8] sm:$0xff]
        %v203 = vld [vmem:[%s154 + $0xb0] sm:$0xff]
        %v204 = vld [vmem:[%s154 + $0xb8] sm:$0xff]
        %v205 = vld [vmem:[%s154 + $0xc0] sm:$0xff]
        %v206 = vld [vmem:[%s154 + $0xc8] sm:$0xff]
        %v207 = vld [vmem:[%s154 + $0xd0] sm:$0xff]
        %v208 = vld [vmem:[%s154 + $0xd8] sm:$0xff]
        %v209 = vld [vmem:[%s154 + $0xe0] sm:$0xff]
        %v210 = vld [vmem:[%s154 + $0xe8] sm:$0xff]
        %v211 = vld [vmem:[%s154 + $0xf0] sm:$0xff]
        %v212 = vld [vmem:[%s154 + $0xf8] sm:$0xff]
        %v213 = vld [vmem:[%s154 + $0x100] sm:$0xff]
        %v214 = vld [vmem:[%s154 + $0x108] sm:$0xff]
        %v215 = vld [vmem:[%s154 + $0x110] sm:$0xff]
        %v216 = vld [vmem:[%s154 + $0x118] sm:$0xff]
        %v217 = vld [vmem:[%s154 + $0x120] sm:$0xff]
        %v218 = vld [vmem:[%s154 + $0x128] sm:$0xff]
        %v219 = vld [vmem:[%s154 + $0x130] sm:$0xff]
        %v220 = vld [vmem:[%s154 + $0x138] sm:$0xff]
        %v221 = vld [vmem:[%s154 + $0x140] sm:$0xff]
        %v222 = vld [vmem:[%s154 + $0x148] sm:$0xff]
        %v223 = vld [vmem:[%s154 + $0x150] sm:$0xff]
        %v224 = vld [vmem:[%s154 + $0x158] sm:$0xff]
        %v225 = vld [vmem:[%s154 + $0x160] sm:$0xff]
        %v226 = vld [vmem:[%s154 + $0x168] sm:$0xff]
        %v227 = vld [vmem:[%s154 + $0x170] sm:$0xff]
        %v228 = vld [vmem:[%s154 + $0x178] sm:$0xff]
        %v229 = vld [vmem:[%s154 + $0x180] sm:$0xff]
        %v230 = vld [vmem:[%s154 + $0x188] sm:$0xff]
        %v231 = vld [vmem:[%s154 + $0x190] sm:$0xff]
        %v232 = vld [vmem:[%s154 + $0x198] sm:$0xff]
        %v233 = vld [vmem:[%s154 + $0x1a0] sm:$0xff]
        %v234 = vld [vmem:[%s154 + $0x1a8] sm:$0xff]
        %v235 = vld [vmem:[%s154 + $0x1b0] sm:$0xff]
        %v236 = vld [vmem:[%s154 + $0x1b8] sm:$0xff]
        %v237 = vld [vmem:[%s154 + $0x1c0] sm:$0xff]
        %v238 = vld [vmem:[%s154 + $0x1c8] sm:$0xff]
        %v239 = vld [vmem:[%s154 + $0x1d0] sm:$0xff]
        %v240 = vld [vmem:[%s154 + $0x1d8] sm:$0xff]
        %v241 = vld [vmem:[%s154 + $0x1e0] sm:$0xff]
        %v242 = vld [vmem:[%s154 + $0x1e8] sm:$0xff]
        %v243 = vld [vmem:[%s154 + $0x1f0] sm:$0xff]
        %v244 = vld [vmem:[%s154 + $0x1f8] sm:$0xff]
        %v245 = vld [vmem:[%s154 + $0x200] sm:$0xff]
        %v246 = vld [vmem:[%s154 + $0x208] sm:$0xff]
        %v247 = vld [vmem:[%s154 + $0x210] sm:$0xff]
        %v248 = vld [vmem:[%s154 + $0x218] sm:$0xff]
        %v249 = vld [vmem:[%s154 + $0x220] sm:$0xff]
        %v250 = vld [vmem:[%s154 + $0x228] sm:$0xff]
        %v251 = vld [vmem:[%s154 + $0x230] sm:$0xff]
        %v252 = vld [vmem:[%s154 + $0x238] sm:$0xff]
        %v253 = vld [vmem:[%s154 + $0x240] sm:$0xff]
        %v254 = vld [vmem:[%s154 + $0x248] sm:$0xff]
        %v255 = vld [vmem:[%s154 + $0x250] sm:$0xff]
        %v256 = vld [vmem:[%s154 + $0x258] sm:$0xff]
        %v257 = vld [vmem:[%s154 + $0x260] sm:$0xff]
        %v258 = vld [vmem:[%s154 + $0x268] sm:$0xff]
        %v259 = vld [vmem:[%s154 + $0x270] sm:$0xff]
        %v260 = vld [vmem:[%s154 + $0x278] sm:$0xff]
        %v261 = vld [vmem:[%s154 + $0x280] sm:$0xff]
        %v262 = vld [vmem:[%s154 + $0x288] sm:$0xff]
        %v263 = vld [vmem:[%s154 + $0x290] sm:$0xff]
        %v264 = vld [vmem:[%s154 + $0x298] sm:$0xff]
        %v265 = vld [vmem:[%s154 + $0x2a0] sm:$0xff]
        %v266 = vld [vmem:[%s154 + $0x2a8] sm:$0xff]
        %v267 = vld [vmem:[%s154 + $0x2b0] sm:$0xff]
        %v268 = vld [vmem:[%s154 + $0x2b8] sm:$0xff]
        %v269 = vld [vmem:[%s154 + $0x2c0] sm:$0xff]
        %v270 = vld [vmem:[%s154 + $0x2c8] sm:$0xff]
        %v271 = vld [vmem:[%s154 + $0x2d0] sm:$0xff]
        %v272 = vld [vmem:[%s154 + $0x2d8] sm:$0xff]
        %v273 = vld [vmem:[%s154 + $0x2e0] sm:$0xff]
        %v274 = vld [vmem:[%s154 + $0x2e8] sm:$0xff]
        %v275 = vld [vmem:[%s154 + $0x2f0] sm:$0xff]
        %v276 = vld [vmem:[%s154 + $0x2f8] sm:$0xff]
        %v277 = vld [vmem:[%s154 + $0x300] sm:$0xff]
        %v278 = vld [vmem:[%s154 + $0x308] sm:$0xff]
        %v279 = vld [vmem:[%s154 + $0x310] sm:$0xff]
        %v280 = vld [vmem:[%s154 + $0x318] sm:$0xff]
        %v281 = vld [vmem:[%s154 + $0x320] sm:$0xff]
        %v282 = vld [vmem:[%s154 + $0x328] sm:$0xff]
        %v283 = vld [vmem:[%s154 + $0x330] sm:$0xff]
        %v284 = vld [vmem:[%s154 + $0x338] sm:$0xff]
        %v285 = vld [vmem:[%s154 + $0x340] sm:$0xff]
        %v286 = vld [vmem:[%s154 + $0x348] sm:$0xff]
        %v287 = vld [vmem:[%s154 + $0x350] sm:$0xff]
        %v288 = vld [vmem:[%s154 + $0x358] sm:$0xff]
        %v289 = vld [vmem:[%s154 + $0x360] sm:$0xff]
        %v290 = vld [vmem:[%s154 + $0x368] sm:$0xff]
        %v291 = vld [vmem:[%s154 + $0x370] sm:$0xff]
        %v292 = vld [vmem:[%s154 + $0x378] sm:$0xff]
        %v293 = vld [vmem:[%s154 + $0x380] sm:$0xff]
        %v294 = vld [vmem:[%s154 + $0x388] sm:$0xff]
        %v295 = vld [vmem:[%s154 + $0x390] sm:$0xff]
        %v296 = vld [vmem:[%s154 + $0x398] sm:$0xff]
        %v297 = vld [vmem:[%s154 + $0x3a0] sm:$0xff]
        %v298 = vld [vmem:[%s154 + $0x3a8] sm:$0xff]
        %v299 = vld [vmem:[%s154 + $0x3b0] sm:$0xff]
        %v300 = vld [vmem:[%s154 + $0x3b8] sm:$0xff]
        %v301 = vld [vmem:[%s154 + $0x3c0] sm:$0xff]
        %v302 = vld [vmem:[%s154 + $0x3c8] sm:$0xff]
        %v303 = vld [vmem:[%s154 + $0x3d0] sm:$0xff]
        %v304 = vld [vmem:[%s154 + $0x3d8] sm:$0xff]
        %v305 = vld [vmem:[%s154 + $0x3e0] sm:$0xff]
        %v306 = vld [vmem:[%s154 + $0x3e8] sm:$0xff]
        %v307 = vld [vmem:[%s154 + $0x3f0] sm:$0xff]
        %v308 = vld [vmem:[%s154 + $0x3f8] sm:$0xff]
        %v309 = vld [vmem:[%s154 + $0x400] sm:$0xff]
        %v310 = vld [vmem:[%s154 + $0x408] sm:$0xff]
        %v311 = vld [vmem:[%s154 + $0x410] sm:$0xff]
        %v312 = vld [vmem:[%s154 + $0x418] sm:$0xff]
        %v313 = vld [vmem:[%s154 + $0x420] sm:$0xff]
        %v314 = vld [vmem:[%s154 + $0x428] sm:$0xff]
        %v315 = vld [vmem:[%s154 + $0x430] sm:$0xff]
        %v316 = vld [vmem:[%s154 + $0x438] sm:$0xff]
        %v317 = vld [vmem:[%s154 + $0x440] sm:$0xff]
        %v318 = vld [vmem:[%s154 + $0x448] sm:$0xff]
        %v319 = vld [vmem:[%s154 + $0x450] sm:$0xff]
        %v320 = vld [vmem:[%s154 + $0x458] sm:$0xff]
        %v321 = vld [vmem:[%s154 + $0x460] sm:$0xff]
        %v322 = vld [vmem:[%s154 + $0x468] sm:$0xff]
        %v323 = vld [vmem:[%s154 + $0x470] sm:$0xff]
        %v324 = vld [vmem:[%s154 + $0x478] sm:$0xff]
        %v325 = vld [vmem:[%s154 + $0x480] sm:$0xff]
        %v326 = vld [vmem:[%s154 + $0x488] sm:$0xff]
        %v327 = vld [vmem:[%s154 + $0x490] sm:$0xff]
        %v328 = vld [vmem:[%s154 + $0x498] sm:$0xff]
        %v329 = vld [vmem:[%s154 + $0x4a0] sm:$0xff]
        %v330 = vld [vmem:[%s154 + $0x4a8] sm:$0xff]
        %v331 = vld [vmem:[%s154 + $0x4b0] sm:$0xff]
        %v332 = vld [vmem:[%s154 + $0x4b8] sm:$0xff]
        %v333 = vld [vmem:[%s154 + $0x4c0] sm:$0xff]
        %v334 = vld [vmem:[%s154 + $0x4c8] sm:$0xff]
        %v335 = vld [vmem:[%s154 + $0x4d0] sm:$0xff]
        %v336 = vld [vmem:[%s154 + $0x4d8] sm:$0xff]
        %v337 = vld [vmem:[%s154 + $0x4e0] sm:$0xff]
        %v338 = vld [vmem:[%s154 + $0x4e8] sm:$0xff]
        %v339 = vld [vmem:[%s154 + $0x4f0] sm:$0xff]
        %v340 = vld [vmem:[%s154 + $0x4f8] sm:$0xff]
        %v341 = vld [vmem:[%s154 + $0x500] sm:$0xff]
        %v342 = vld [vmem:[%s154 + $0x508] sm:$0xff]
        %v343 = vld [vmem:[%s154 + $0x510] sm:$0xff]
        %v344 = vld [vmem:[%s154 + $0x518] sm:$0xff]
        %v345 = vld [vmem:[%s154 + $0x520] sm:$0xff]
        %v346 = vld [vmem:[%s154 + $0x528] sm:$0xff]
        %v347 = vld [vmem:[%s154 + $0x530] sm:$0xff]
        %v348 = vld [vmem:[%s154 + $0x538] sm:$0xff]
        %v349 = vld [vmem:[%s154 + $0x540] sm:$0xff]
        %v350 = vld [vmem:[%s154 + $0x548] sm:$0xff]
        %v351 = vld [vmem:[%s154 + $0x550] sm:$0xff]
        %v352 = vld [vmem:[%s154 + $0x558] sm:$0xff]
        %v353 = vld [vmem:[%s154 + $0x560] sm:$0xff]
        %v354 = vld [vmem:[%s154 + $0x568] sm:$0xff]
        %v355 = vld [vmem:[%s154 + $0x570] sm:$0xff]
        %v356 = vld [vmem:[%s154 + $0x578] sm:$0xff]
        %v357 = vld [vmem:[%s154 + $0x580] sm:$0xff]
        %v358 = vld [vmem:[%s154 + $0x588] sm:$0xff]
        %v359 = vld [vmem:[%s154 + $0x590] sm:$0xff]
        %v360 = vld [vmem:[%s154 + $0x598] sm:$0xff]
        %v361 = vld [vmem:[%s154 + $0x5a0] sm:$0xff]
        %v362 = vld [vmem:[%s154 + $0x5a8] sm:$0xff]
        %v363 = vld [vmem:[%s154 + $0x5b0] sm:$0xff]
        %v364 = vld [vmem:[%s154 + $0x5b8] sm:$0xff]
        %v365 = vld [vmem:[%s154 + $0x5c0] sm:$0xff]
        %v366 = vld [vmem:[%s154 + $0x5c8] sm:$0xff]
        %v367 = vld [vmem:[%s154 + $0x5d0] sm:$0xff]
        %v368 = vld [vmem:[%s154 + $0x5d8] sm:$0xff]
        %v369 = vld [vmem:[%s154 + $0x5e0] sm:$0xff]
        %v370 = vld [vmem:[%s154 + $0x5e8] sm:$0xff]
        %v371 = vld [vmem:[%s154 + $0x5f0] sm:$0xff]
        %v372 = vld [vmem:[%s154 + $0x5f8] sm:$0xff]
        %v373 = vld [vmem:[%s154 + $0x600] sm:$0xff]
        %v374 = vld [vmem:[%s154 + $0x608] sm:$0xff]
        %v375 = vld [vmem:[%s154 + $0x610] sm:$0xff]
        %v376 = vld [vmem:[%s154 + $0x618] sm:$0xff]
        %v377 = vld [vmem:[%s154 + $0x620] sm:$0xff]
        %v378 = vld [vmem:[%s154 + $0x628] sm:$0xff]
        %v379 = vld [vmem:[%s154 + $0x630] sm:$0xff]
        %v380 = vld [vmem:[%s154 + $0x638] sm:$0xff]
        %v381 = vld [vmem:[%s154 + $0x640] sm:$0xff]
        %v382 = vld [vmem:[%s154 + $0x648] sm:$0xff]
        %v383 = vld [vmem:[%s154 + $0x650] sm:$0xff]
        %v384 = vld [vmem:[%s154 + $0x658] sm:$0xff]
        %v385 = vld [vmem:[%s154 + $0x660] sm:$0xff]
        %v386 = vld [vmem:[%s154 + $0x668] sm:$0xff]
        %v387 = vld [vmem:[%s154 + $0x670] sm:$0xff]
        %v388 = vld [vmem:[%s154 + $0x678] sm:$0xff]
        %v389 = vld [vmem:[%s154 + $0x680] sm:$0xff]
        %v390 = vld [vmem:[%s154 + $0x688] sm:$0xff]
        %v391 = vld [vmem:[%s154 + $0x690] sm:$0xff]
        %v392 = vld [vmem:[%s154 + $0x698] sm:$0xff]
        %v393 = vld [vmem:[%s154 + $0x6a0] sm:$0xff]
        %v394 = vld [vmem:[%s154 + $0x6a8] sm:$0xff]
        %v395 = vld [vmem:[%s154 + $0x6b0] sm:$0xff]
        %v396 = vld [vmem:[%s154 + $0x6b8] sm:$0xff]
        %v397 = vld [vmem:[%s154 + $0x6c0] sm:$0xff]
        %v398 = vld [vmem:[%s154 + $0x6c8] sm:$0xff]
        %v399 = vld [vmem:[%s154 + $0x6d0] sm:$0xff]
        %v400 = vld [vmem:[%s154 + $0x6d8] sm:$0xff]
        %v401 = vld [vmem:[%s154 + $0x6e0] sm:$0xff]
        %v402 = vld [vmem:[%s154 + $0x6e8] sm:$0xff]
        %v403 = vld [vmem:[%s154 + $0x6f0] sm:$0xff]
        %v404 = vld [vmem:[%s154 + $0x6f8] sm:$0xff]
        %v405 = vld [vmem:[%s154 + $0x700] sm:$0xff]
        %v406 = vld [vmem:[%s154 + $0x708] sm:$0xff]
        %v407 = vld [vmem:[%s154 + $0x710] sm:$0xff]
        %v408 = vld [vmem:[%s154 + $0x718] sm:$0xff]
        %v409 = vld [vmem:[%s154 + $0x720] sm:$0xff]
        %v410 = vld [vmem:[%s154 + $0x728] sm:$0xff]
        %v411 = vld [vmem:[%s154 + $0x730] sm:$0xff]
        %v412 = vld [vmem:[%s154 + $0x738] sm:$0xff]
        %v413 = vld [vmem:[%s154 + $0x740] sm:$0xff]
        %v414 = vld [vmem:[%s154 + $0x748] sm:$0xff]
        %v415 = vld [vmem:[%s154 + $0x750] sm:$0xff]
        %v416 = vld [vmem:[%s154 + $0x758] sm:$0xff]
        %v417 = vld [vmem:[%s154 + $0x760] sm:$0xff]
        %v418 = vld [vmem:[%s154 + $0x768] sm:$0xff]
        %v419 = vld [vmem:[%s154 + $0x770] sm:$0xff]
        %v420 = vld [vmem:[%s154 + $0x778] sm:$0xff]
        %v421 = vld [vmem:[%s154 + $0x780] sm:$0xff]
        %v422 = vld [vmem:[%s154 + $0x788] sm:$0xff]
        %v423 = vld [vmem:[%s154 + $0x790] sm:$0xff]
        %v424 = vld [vmem:[%s154 + $0x798] sm:$0xff]
        %v425 = vld [vmem:[%s154 + $0x7a0] sm:$0xff]
        %v426 = vld [vmem:[%s154 + $0x7a8] sm:$0xff]
        %v427 = vld [vmem:[%s154 + $0x7b0] sm:$0xff]
        %v428 = vld [vmem:[%s154 + $0x7b8] sm:$0xff]
        %v429 = vld [vmem:[%s154 + $0x7c0] sm:$0xff]
        %v430 = vld [vmem:[%s154 + $0x7c8] sm:$0xff]
        %v431 = vld [vmem:[%s154 + $0x7d0] sm:$0xff]
        %v432 = vld [vmem:[%s154 + $0x7d8] sm:$0xff]
        %v433 = vld [vmem:[%s154 + $0x7e0] sm:$0xff]
        %v434 = vld [vmem:[%s154 + $0x7e8] sm:$0xff]
        %v435 = vld [vmem:[%s154 + $0x7f0] sm:$0xff]
        %v436 = vld [vmem:[%s154 + $0x7f8] sm:$0xff]
        %v437 = vld [vmem:[%s154 + $0x800] sm:$0xff]
        %v438 = vld [vmem:[%s154 + $0x808] sm:$0xff]
        %v439 = vld [vmem:[%s154 + $0x810] sm:$0xff]
        %v440 = vld [vmem:[%s154 + $0x818] sm:$0xff]
        %v441 = vld [vmem:[%s154 + $0x820] sm:$0xff]
        %v442 = vld [vmem:[%s154 + $0x828] sm:$0xff]
        %v443 = vld [vmem:[%s154 + $0x830] sm:$0xff]
        %v444 = vld [vmem:[%s154 + $0x838] sm:$0xff]
        %v445 = vld [vmem:[%s154 + $0x840] sm:$0xff]
        %v446 = vld [vmem:[%s154 + $0x848] sm:$0xff]
        %v447 = vld [vmem:[%s154 + $0x850] sm:$0xff]
        %v448 = vld [vmem:[%s154 + $0x858] sm:$0xff]
        %v449 = vld [vmem:[%s154 + $0x860] sm:$0xff]
        %v450 = vld [vmem:[%s154 + $0x868] sm:$0xff]
        %v451 = vld [vmem:[%s154 + $0x870] sm:$0xff]
        %v452 = vld [vmem:[%s154 + $0x878] sm:$0xff]
        %v453 = vld [vmem:[%s154 + $0x880] sm:$0xff]
        %v454 = vld [vmem:[%s154 + $0x888] sm:$0xff]
        %v455 = vld [vmem:[%s154 + $0x890] sm:$0xff]
        %v456 = vld [vmem:[%s154 + $0x898] sm:$0xff]
        %v457 = vld [vmem:[%s154 + $0x8a0] sm:$0xff]
        %v458 = vld [vmem:[%s154 + $0x8a8] sm:$0xff]
        %v459 = vld [vmem:[%s154 + $0x8b0] sm:$0xff]
        %v460 = vld [vmem:[%s154 + $0x8b8] sm:$0xff]
        %v461 = vld [vmem:[%s154 + $0x8c0] sm:$0xff]
        %v462 = vld [vmem:[%s154 + $0x8c8] sm:$0xff]
        %v463 = vld [vmem:[%s154 + $0x8d0] sm:$0xff]
        %v464 = vld [vmem:[%s154 + $0x8d8] sm:$0xff]
        %v465 = vld [vmem:[%s154 + $0x8e0] sm:$0xff]
        %v466 = vld [vmem:[%s154 + $0x8e8] sm:$0xff]
        %v467 = vld [vmem:[%s154 + $0x8f0] sm:$0xff]
        %v468 = vld [vmem:[%s154 + $0x8f8] sm:$0xff]
        %v469 = vld [vmem:[%s154 + $0x900] sm:$0xff]
        %v470 = vld [vmem:[%s154 + $0x908] sm:$0xff]
        %v471 = vld [vmem:[%s154 + $0x910] sm:$0xff]
        %v472 = vld [vmem:[%s154 + $0x918] sm:$0xff]
        %v473 = vld [vmem:[%s154 + $0x920] sm:$0xff]
        %v474 = vld [vmem:[%s154 + $0x928] sm:$0xff]
        %v475 = vld [vmem:[%s154 + $0x930] sm:$0xff]
        %v476 = vld [vmem:[%s154 + $0x938] sm:$0xff]
        %v477 = vld [vmem:[%s154 + $0x940] sm:$0xff]
        %v478 = vld [vmem:[%s154 + $0x948] sm:$0xff]
        %v479 = vld [vmem:[%s154 + $0x950] sm:$0xff]
        %v480 = vld [vmem:[%s154 + $0x958] sm:$0xff]
        %v481 = vld [vmem:[%s154 + $0x960] sm:$0xff]
        %v482 = vld [vmem:[%s154 + $0x968] sm:$0xff]
        %v483 = vld [vmem:[%s154 + $0x970] sm:$0xff]
        %v484 = vld [vmem:[%s154 + $0x978] sm:$0xff]
        %v485 = vld [vmem:[%s154 + $0x980] sm:$0xff]
        %v486 = vld [vmem:[%s154 + $0x988] sm:$0xff]
        %v487 = vld [vmem:[%s154 + $0x990] sm:$0xff]
        %v488 = vld [vmem:[%s154 + $0x998] sm:$0xff]
        %v489 = vld [vmem:[%s154 + $0x9a0] sm:$0xff]
        %v490 = vld [vmem:[%s154 + $0x9a8] sm:$0xff]
        %v491 = vld [vmem:[%s154 + $0x9b0] sm:$0xff]
        %v492 = vld [vmem:[%s154 + $0x9b8] sm:$0xff]
        %v493 = vld [vmem:[%s154 + $0x9c0] sm:$0xff]
        %v494 = vld [vmem:[%s154 + $0x9c8] sm:$0xff]
        %v495 = vld [vmem:[%s154 + $0x9d0] sm:$0xff]
        %v496 = vld [vmem:[%s154 + $0x9d8] sm:$0xff]
        %v497 = vld [vmem:[%s154 + $0x9e0] sm:$0xff]
        %v498 = vld [vmem:[%s154 + $0x9e8] sm:$0xff]
        %v499 = vld [vmem:[%s154 + $0x9f0] sm:$0xff]
        %v500 = vld [vmem:[%s154 + $0x9f8] sm:$0xff]
        %v501 = vld [vmem:[%s154 + $0xa00] sm:$0xff]
        %v502 = vld [vmem:[%s154 + $0xa08] sm:$0xff]
        %v503 = vld [vmem:[%s154 + $0xa10] sm:$0xff]
        %v504 = vld [vmem:[%s154 + $0xa18] sm:$0xff]
        %v505 = vld [vmem:[%s154 + $0xa20] sm:$0xff]
        %v506 = vld [vmem:[%s154 + $0xa28] sm:$0xff]
        %v507 = vld [vmem:[%s154 + $0xa30] sm:$0xff]
        %v508 = vld [vmem:[%s154 + $0xa38] sm:$0xff]
        %v509 = vld [vmem:[%s154 + $0xa40] sm:$0xff]
        %v510 = vld [vmem:[%s154 + $0xa48] sm:$0xff]
        %v511 = vld [vmem:[%s154 + $0xa50] sm:$0xff]
        %v512 = vld [vmem:[%s154 + $0xa58] sm:$0xff]
        %v513 = vld [vmem:[%s154 + $0xa60] sm:$0xff]
        %v514 = vld [vmem:[%s154 + $0xa68] sm:$0xff]
        %v515 = vld [vmem:[%s154 + $0xa70] sm:$0xff]
        %v516 = vld [vmem:[%s154 + $0xa78] sm:$0xff]
        %v517 = vld [vmem:[%s154 + $0xa80] sm:$0xff]
        %v518 = vld [vmem:[%s154 + $0xa88] sm:$0xff]
        %v519 = vld [vmem:[%s154 + $0xa90] sm:$0xff]
        %v520 = vld [vmem:[%s154 + $0xa98] sm:$0xff]
        %v521 = vld [vmem:[%s154 + $0xaa0] sm:$0xff]
        %v522 = vld [vmem:[%s154 + $0xaa8] sm:$0xff]
        %v523 = vld [vmem:[%s154 + $0xab0] sm:$0xff]
        %v524 = vld [vmem:[%s154 + $0xab8] sm:$0xff]
        %v525 = vld [vmem:[%s154 + $0xac0] sm:$0xff]
        %v526 = vld [vmem:[%s154 + $0xac8] sm:$0xff]
        %v527 = vld [vmem:[%s154 + $0xad0] sm:$0xff]
        %v528 = vld [vmem:[%s154 + $0xad8] sm:$0xff]
        %v529 = vld [vmem:[%s154 + $0xae0] sm:$0xff]
        %v530 = vld [vmem:[%s154 + $0xae8] sm:$0xff]
        %v531 = vld [vmem:[%s154 + $0xaf0] sm:$0xff]
        %v532 = vld [vmem:[%s154 + $0xaf8] sm:$0xff]
        %v533 = vld [vmem:[%s154 + $0xb00] sm:$0xff]
        %v534 = vld [vmem:[%s154 + $0xb08] sm:$0xff]
        %v535 = vld [vmem:[%s154 + $0xb10] sm:$0xff]
        %v536 = vld [vmem:[%s154 + $0xb18] sm:$0xff]
        %v537 = vld [vmem:[%s154 + $0xb20] sm:$0xff]
        %v538 = vld [vmem:[%s154 + $0xb28] sm:$0xff]
        %v539 = vld [vmem:[%s154 + $0xb30] sm:$0xff]
        %v540 = vld [vmem:[%s154 + $0xb38] sm:$0xff]
        %v541 = vld [vmem:[%s154 + $0xb40] sm:$0xff]
        %v542 = vld [vmem:[%s154 + $0xb48] sm:$0xff]
        %v543 = vld [vmem:[%s154 + $0xb50] sm:$0xff]
        %v544 = vld [vmem:[%s154 + $0xb58] sm:$0xff]
        %v545 = vld [vmem:[%s154 + $0xb60] sm:$0xff]
        %v546 = vld [vmem:[%s154 + $0xb68] sm:$0xff]
        %v547 = vld [vmem:[%s154 + $0xb70] sm:$0xff]
        %v548 = vld [vmem:[%s154 + $0xb78] sm:$0xff]
        %v549 = vld [vmem:[%s154 + $0xb80] sm:$0xff]
        %v550 = vld [vmem:[%s154 + $0xb88] sm:$0xff]
        %v551 = vld [vmem:[%s154 + $0xb90] sm:$0xff]
        %v552 = vld [vmem:[%s154 + $0xb98] sm:$0xff]
        %v553 = vld [vmem:[%s154 + $0xba0] sm:$0xff]
        %v554 = vld [vmem:[%s154 + $0xba8] sm:$0xff]
        %v555 = vld [vmem:[%s154 + $0xbb0] sm:$0xff]
        %v556 = vld [vmem:[%s154 + $0xbb8] sm:$0xff]
        %v557 = vld [vmem:[%s154 + $0xbc0] sm:$0xff]
        %v558 = vld [vmem:[%s154 + $0xbc8] sm:$0xff]
        %v559 = vld [vmem:[%s154 + $0xbd0] sm:$0xff]
        %v560 = vld [vmem:[%s154 + $0xbd8] sm:$0xff]
        %v561 = vld [vmem:[%s154 + $0xbe0] sm:$0xff]
        %v562 = vld [vmem:[%s154 + $0xbe8] sm:$0xff]
        %v563 = vld [vmem:[%s154 + $0xbf0] sm:$0xff]
        %v564 = vld [vmem:[%s154 + $0xbf8] sm:$0xff]
        %v565 = vld [vmem:[%s154 + $0xc00] sm:$0xff]
        %v566 = vld [vmem:[%s154 + $0xc08] sm:$0xff]
        %v567 = vld [vmem:[%s154 + $0xc10] sm:$0xff]
        %v568 = vld [vmem:[%s154 + $0xc18] sm:$0xff]
        %v569 = vld [vmem:[%s154 + $0xc20] sm:$0xff]
        %v570 = vld [vmem:[%s154 + $0xc28] sm:$0xff]
        %v571 = vld [vmem:[%s154 + $0xc30] sm:$0xff]
        %v572 = vld [vmem:[%s154 + $0xc38] sm:$0xff]
        %v573 = vld [vmem:[%s154 + $0xc40] sm:$0xff]
        %v574 = vld [vmem:[%s154 + $0xc48] sm:$0xff]
        %v575 = vld [vmem:[%s154 + $0xc50] sm:$0xff]
        %v576 = vld [vmem:[%s154 + $0xc58] sm:$0xff]
        %v577 = vld [vmem:[%s154 + $0xc60] sm:$0xff]
        %v578 = vld [vmem:[%s154 + $0xc68] sm:$0xff]
        %v579 = vld [vmem:[%s154 + $0xc70] sm:$0xff]
        %v580 = vld [vmem:[%s154 + $0xc78] sm:$0xff]
        %v581 = vld [vmem:[%s154 + $0xc80] sm:$0xff]
        %v582 = vld [vmem:[%s154 + $0xc88] sm:$0xff]
        %v583 = vld [vmem:[%s154 + $0xc90] sm:$0xff]
        %v584 = vld [vmem:[%s154 + $0xc98] sm:$0xff]
        %v585 = vld [vmem:[%s154 + $0xca0] sm:$0xff]
        %v586 = vld [vmem:[%s154 + $0xca8] sm:$0xff]
        %v587 = vld [vmem:[%s154 + $0xcb0] sm:$0xff]
        %v588 = vld [vmem:[%s154 + $0xcb8] sm:$0xff]
        %v589 = vld [vmem:[%s154 + $0xcc0] sm:$0xff]
        %v590 = vld [vmem:[%s154 + $0xcc8] sm:$0xff]
        %v591 = vld [vmem:[%s154 + $0xcd0] sm:$0xff]
        %v592 = vld [vmem:[%s154 + $0xcd8] sm:$0xff]
        %v593 = vld [vmem:[%s154 + $0xce0] sm:$0xff]
        %v594 = vld [vmem:[%s154 + $0xce8] sm:$0xff]
        %v595 = vld [vmem:[%s154 + $0xcf0] sm:$0xff]
        %v596 = vld [vmem:[%s154 + $0xcf8] sm:$0xff]
        %v597 = vld [vmem:[%s154 + $0xd00] sm:$0xff]
        %v598 = vld [vmem:[%s154 + $0xd08] sm:$0xff]
        %v599 = vld [vmem:[%s154 + $0xd10] sm:$0xff]
        %v600 = vld [vmem:[%s154 + $0xd18] sm:$0xff]
        %v601 = vld [vmem:[%s154 + $0xd20] sm:$0xff]
        %v602 = vld [vmem:[%s154 + $0xd28] sm:$0xff]
        %v603 = vld [vmem:[%s154 + $0xd30] sm:$0xff]
        %v604 = vld [vmem:[%s154 + $0xd38] sm:$0xff]
        %v605 = vld [vmem:[%s154 + $0xd40] sm:$0xff]
        %v606 = vld [vmem:[%s154 + $0xd48] sm:$0xff]
        %v607 = vld [vmem:[%s154 + $0xd50] sm:$0xff]
        %v608 = vld [vmem:[%s154 + $0xd58] sm:$0xff]
        %v609 = vld [vmem:[%s154 + $0xd60] sm:$0xff]
        %v610 = vld [vmem:[%s154 + $0xd68] sm:$0xff]
        %v611 = vld [vmem:[%s154 + $0xd70] sm:$0xff]
        %v612 = vld [vmem:[%s154 + $0xd78] sm:$0xff]
        %v613 = vld [vmem:[%s154 + $0xd80] sm:$0xff]
        %v614 = vld [vmem:[%s154 + $0xd88] sm:$0xff]
        %v615 = vld [vmem:[%s154 + $0xd90] sm:$0xff]
        %v616 = vld [vmem:[%s154 + $0xd98] sm:$0xff]
        %v617 = vld [vmem:[%s154 + $0xda0] sm:$0xff]
        %v618 = vld [vmem:[%s154 + $0xda8] sm:$0xff]
        %v619 = vld [vmem:[%s154 + $0xdb0] sm:$0xff]
        %v620 = vld [vmem:[%s154 + $0xdb8] sm:$0xff]
        %v621 = vld [vmem:[%s154 + $0xdc0] sm:$0xff]
        %v622 = vld [vmem:[%s154 + $0xdc8] sm:$0xff]
        %v623 = vld [vmem:[%s154 + $0xdd0] sm:$0xff]
        %v624 = vld [vmem:[%s154 + $0xdd8] sm:$0xff]
        %v625 = vld [vmem:[%s154 + $0xde0] sm:$0xff]
        %v626 = vld [vmem:[%s154 + $0xde8] sm:$0xff]
        %v627 = vld [vmem:[%s154 + $0xdf0] sm:$0xff]
        %v628 = vld [vmem:[%s154 + $0xdf8] sm:$0xff]
        %v629 = vld [vmem:[%s154 + $0xe00] sm:$0xff]
        %v630 = vld [vmem:[%s154 + $0xe08] sm:$0xff]
        %v631 = vld [vmem:[%s154 + $0xe10] sm:$0xff]
        %v632 = vld [vmem:[%s154 + $0xe18] sm:$0xff]
        %v633 = vld [vmem:[%s154 + $0xe20] sm:$0xff]
        %v634 = vld [vmem:[%s154 + $0xe28] sm:$0xff]
        %v635 = vld [vmem:[%s154 + $0xe30] sm:$0xff]
        %v636 = vld [vmem:[%s154 + $0xe38] sm:$0xff]
        %v637 = vld [vmem:[%s154 + $0xe40] sm:$0xff]
        %v638 = vld [vmem:[%s154 + $0xe48] sm:$0xff]
        %v639 = vld [vmem:[%s154 + $0xe50] sm:$0xff]
        %v640 = vld [vmem:[%s154 + $0xe58] sm:$0xff]
        %v641 = vld [vmem:[%s154 + $0xe60] sm:$0xff]
        %v642 = vld [vmem:[%s154 + $0xe68] sm:$0xff]
        %v643 = vld [vmem:[%s154 + $0xe70] sm:$0xff]
        %v644 = vld [vmem:[%s154 + $0xe78] sm:$0xff]
        %v645 = vld [vmem:[%s154 + $0xe80] sm:$0xff]
        %v646 = vld [vmem:[%s154 + $0xe88] sm:$0xff]
        %v647 = vld [vmem:[%s154 + $0xe90] sm:$0xff]
        %v648 = vld [vmem:[%s154 + $0xe98] sm:$0xff]
        %v649 = vld [vmem:[%s154 + $0xea0] sm:$0xff]
        %v650 = vld [vmem:[%s154 + $0xea8] sm:$0xff]
        %v651 = vld [vmem:[%s154 + $0xeb0] sm:$0xff]
        %v652 = vld [vmem:[%s154 + $0xeb8] sm:$0xff]
        %v653 = vld [vmem:[%s154 + $0xec0] sm:$0xff]
        %v654 = vld [vmem:[%s154 + $0xec8] sm:$0xff]
        %v655 = vld [vmem:[%s154 + $0xed0] sm:$0xff]
        %v656 = vld [vmem:[%s154 + $0xed8] sm:$0xff]
        %v657 = vld [vmem:[%s154 + $0xee0] sm:$0xff]
        %v658 = vld [vmem:[%s154 + $0xee8] sm:$0xff]
        %v659 = vld [vmem:[%s154 + $0xef0] sm:$0xff]
        %v660 = vld [vmem:[%s154 + $0xef8] sm:$0xff]
        %v661 = vld [vmem:[%s154 + $0xf00] sm:$0xff]
        %v662 = vld [vmem:[%s154 + $0xf08] sm:$0xff]
        %v663 = vld [vmem:[%s154 + $0xf10] sm:$0xff]
        %v664 = vld [vmem:[%s154 + $0xf18] sm:$0xff]
        %v665 = vld [vmem:[%s154 + $0xf20] sm:$0xff]
        %v666 = vld [vmem:[%s154 + $0xf28] sm:$0xff]
        %v667 = vld [vmem:[%s154 + $0xf30] sm:$0xff]
        %v668 = vld [vmem:[%s154 + $0xf38] sm:$0xff]
        %v669 = vld [vmem:[%s154 + $0xf40] sm:$0xff]
        %v670 = vld [vmem:[%s154 + $0xf48] sm:$0xff]
        %v671 = vld [vmem:[%s154 + $0xf50] sm:$0xff]
        %v672 = vld [vmem:[%s154 + $0xf58] sm:$0xff]
        %v673 = vld [vmem:[%s154 + $0xf60] sm:$0xff]
        %v674 = vld [vmem:[%s154 + $0xf68] sm:$0xff]
        %v675 = vld [vmem:[%s154 + $0xf70] sm:$0xff]
        %v676 = vld [vmem:[%s154 + $0xf78] sm:$0xff]
        %v677 = vld [vmem:[%s154 + $0xf80] sm:$0xff]
        %v678 = vld [vmem:[%s154 + $0xf88] sm:$0xff]
        %v679 = vld [vmem:[%s154 + $0xf90] sm:$0xff]
        %v680 = vld [vmem:[%s154 + $0xf98] sm:$0xff]
        %v681 = vld [vmem:[%s154 + $0xfa0] sm:$0xff]
        %v682 = vld [vmem:[%s154 + $0xfa8] sm:$0xff]
        %v683 = vld [vmem:[%s154 + $0xfb0] sm:$0xff]
        %v684 = vld [vmem:[%s154 + $0xfb8] sm:$0xff]
        %v685 = vld [vmem:[%s154 + $0xfc0] sm:$0xff]
        %v686 = vld [vmem:[%s154 + $0xfc8] sm:$0xff]
        %v687 = vld [vmem:[%s154 + $0xfd0] sm:$0xff]
        %v688 = vld [vmem:[%s154 + $0xfd8] sm:$0xff]
        %v689 = vld [vmem:[%s154 + $0xfe0] sm:$0xff]
        %v690 = vld [vmem:[%s154 + $0xfe8] sm:$0xff]
        %v691 = vld [vmem:[%s154 + $0xff0] sm:$0xff]
        %v692 = vld [vmem:[%s154 + $0xff8] sm:$0xff]
        %v693 = vld [vmem:[%s154 + $0x1000] sm:$0xff]
        %v694 = vld [vmem:[%s154 + $0x1008] sm:$0xff]
        %v695 = vld [vmem:[%s154 + $0x1010] sm:$0xff]
        %v696 = vld [vmem:[%s154 + $0x1018] sm:$0xff]
        %v697 = vld [vmem:[%s154 + $0x1020] sm:$0xff]
        %v698 = vld [vmem:[%s154 + $0x1028] sm:$0xff]
        %v699 = vld [vmem:[%s154 + $0x1030] sm:$0xff]
        %v700 = vld [vmem:[%s154 + $0x1038] sm:$0xff]
        %v701 = vld [vmem:[%s154 + $0x1040] sm:$0xff]
        %v702 = vld [vmem:[%s154 + $0x1048] sm:$0xff]
        %v703 = vld [vmem:[%s154 + $0x1050] sm:$0xff]
        %v704 = vld [vmem:[%s154 + $0x1058] sm:$0xff]
        %v705 = vld [vmem:[%s154 + $0x1060] sm:$0xff]
        %v706 = vld [vmem:[%s154 + $0x1068] sm:$0xff]
        %v707 = vld [vmem:[%s154 + $0x1070] sm:$0xff]
        %v708 = vld [vmem:[%s154 + $0x1078] sm:$0xff]
        %v709 = vld [vmem:[%s154 + $0x1080] sm:$0xff]
        %v710 = vld [vmem:[%s154 + $0x1088] sm:$0xff]
        %v711 = vld [vmem:[%s154 + $0x1090] sm:$0xff]
        %v712 = vld [vmem:[%s154 + $0x1098] sm:$0xff]
        %v713 = vld [vmem:[%s154 + $0x10a0] sm:$0xff]
        %v714 = vld [vmem:[%s154 + $0x10a8] sm:$0xff]
        %v715 = vld [vmem:[%s154 + $0x10b0] sm:$0xff]
        %v716 = vld [vmem:[%s154 + $0x10b8] sm:$0xff]
        %v717 = vld [vmem:[%s154 + $0x10c0] sm:$0xff]
        %v718 = vld [vmem:[%s154 + $0x10c8] sm:$0xff]
        %v719 = vld [vmem:[%s154 + $0x10d0] sm:$0xff]
        %v720 = vld [vmem:[%s154 + $0x10d8] sm:$0xff]
        %v721 = vld [vmem:[%s154 + $0x10e0] sm:$0xff]
        %v722 = vld [vmem:[%s154 + $0x10e8] sm:$0xff]
        %v723 = vld [vmem:[%s154 + $0x10f0] sm:$0xff]
        %v724 = vld [vmem:[%s154 + $0x10f8] sm:$0xff]
        %v725 = vld [vmem:[%s154 + $0x1100] sm:$0xff]
        %v726 = vld [vmem:[%s154 + $0x1108] sm:$0xff]
        %v727 = vld [vmem:[%s154 + $0x1110] sm:$0xff]
        %v728 = vld [vmem:[%s154 + $0x1118] sm:$0xff]
        %v729 = vld [vmem:[%s154 + $0x1120] sm:$0xff]
        %v730 = vld [vmem:[%s154 + $0x1128] sm:$0xff]
        %v731 = vld [vmem:[%s154 + $0x1130] sm:$0xff]
        %v732 = vld [vmem:[%s154 + $0x1138] sm:$0xff]
        %v733 = vld [vmem:[%s154 + $0x1140] sm:$0xff]
        %v734 = vld [vmem:[%s154 + $0x1148] sm:$0xff]
        %v735 = vld [vmem:[%s154 + $0x1150] sm:$0xff]
        %v736 = vld [vmem:[%s154 + $0x1158] sm:$0xff]
        %v737 = vld [vmem:[%s154 + $0x1160] sm:$0xff]
        %v738 = vld [vmem:[%s154 + $0x1168] sm:$0xff]
        %v739 = vld [vmem:[%s154 + $0x1170] sm:$0xff]
        %v740 = vld [vmem:[%s154 + $0x1178] sm:$0xff]
        %v741 = vld [vmem:[%s154 + $0x1180] sm:$0xff]
        %v742 = vld [vmem:[%s154 + $0x1188] sm:$0xff]
        %v743 = vld [vmem:[%s154 + $0x1190] sm:$0xff]
        %v744 = vld [vmem:[%s154 + $0x1198] sm:$0xff]
        %v745 = vld [vmem:[%s154 + $0x11a0] sm:$0xff]
        %v746 = vld [vmem:[%s154 + $0x11a8] sm:$0xff]
        %v747 = vld [vmem:[%s154 + $0x11b0] sm:$0xff]
        %v748 = vld [vmem:[%s154 + $0x11b8] sm:$0xff]
        %v749 = vld [vmem:[%s154 + $0x11c0] sm:$0xff]
        %v750 = vld [vmem:[%s154 + $0x11c8] sm:$0xff]
        %v751 = vld [vmem:[%s154 + $0x11d0] sm:$0xff]
        %v752 = vld [vmem:[%s154 + $0x11d8] sm:$0xff]
        %v753 = vld [vmem:[%s154 + $0x11e0] sm:$0xff]
        %v754 = vld [vmem:[%s154 + $0x11e8] sm:$0xff]
        %v755 = vld [vmem:[%s154 + $0x11f0] sm:$0xff]
        %v756 = vld [vmem:[%s154 + $0x11f8] sm:$0xff]
        %v757 = vld [vmem:[%s154 + $0x1200] sm:$0xff]
        %v758 = vld [vmem:[%s154 + $0x1208] sm:$0xff]
        %v759 = vld [vmem:[%s154 + $0x1210] sm:$0xff]
        %v760 = vld [vmem:[%s154 + $0x1218] sm:$0xff]
        %v761 = vld [vmem:[%s154 + $0x1220] sm:$0xff]
        %v762 = vld [vmem:[%s154 + $0x1228] sm:$0xff]
        %v763 = vld [vmem:[%s154 + $0x1230] sm:$0xff]
        %v764 = vld [vmem:[%s154 + $0x1238] sm:$0xff]
        %v765 = vld [vmem:[%s154 + $0x1240] sm:$0xff]
        %v766 = vld [vmem:[%s154 + $0x1248] sm:$0xff]
        %v767 = vld [vmem:[%s154 + $0x1250] sm:$0xff]
        %v768 = vld [vmem:[%s154 + $0x1258] sm:$0xff]
        %v769 = vld [vmem:[%s154 + $0x1260] sm:$0xff]
        %v770 = vld [vmem:[%s154 + $0x1268] sm:$0xff]
        %v771 = vld [vmem:[%s154 + $0x1270] sm:$0xff]
        %v772 = vld [vmem:[%s154 + $0x1278] sm:$0xff]
        %v773 = vld [vmem:[%s154 + $0x1280] sm:$0xff]
        %v774 = vld [vmem:[%s154 + $0x1288] sm:$0xff]
        %v775 = vld [vmem:[%s154 + $0x1290] sm:$0xff]
        %v776 = vld [vmem:[%s154 + $0x1298] sm:$0xff]
        %v777 = vld [vmem:[%s154 + $0x12a0] sm:$0xff]
        %v778 = vld [vmem:[%s154 + $0x12a8] sm:$0xff]
        %v779 = vld [vmem:[%s154 + $0x12b0] sm:$0xff]
        %v780 = vld [vmem:[%s154 + $0x12b8] sm:$0xff]
        %v781 = vld [vmem:[%s154 + $0x12c0] sm:$0xff]
        %v782 = vld [vmem:[%s154 + $0x12c8] sm:$0xff]
        %v783 = vld [vmem:[%s154 + $0x12d0] sm:$0xff]
        %v784 = vld [vmem:[%s154 + $0x12d8] sm:$0xff]
        %v785 = vld [vmem:[%s154 + $0x12e0] sm:$0xff]
        %v786 = vld [vmem:[%s154 + $0x12e8] sm:$0xff]
        %v787 = vld [vmem:[%s154 + $0x12f0] sm:$0xff]
        %v788 = vld [vmem:[%s154 + $0x12f8] sm:$0xff]
        %v789 = vld [vmem:[%s154 + $0x1300] sm:$0xff]
        %v790 = vld [vmem:[%s154 + $0x1308] sm:$0xff]
        %v791 = vld [vmem:[%s154 + $0x1310] sm:$0xff]
        %v792 = vld [vmem:[%s154 + $0x1318] sm:$0xff]
        %v793 = vld [vmem:[%s154 + $0x1320] sm:$0xff]
        %v794 = vld [vmem:[%s154 + $0x1328] sm:$0xff]
        %v795 = vld [vmem:[%s154 + $0x1330] sm:$0xff]
        %v796 = vld [vmem:[%s154 + $0x1338] sm:$0xff]
        %v797 = vld [vmem:[%s154 + $0x1340] sm:$0xff]
        %v798 = vld [vmem:[%s154 + $0x1348] sm:$0xff]
        %v799 = vld [vmem:[%s154 + $0x1350] sm:$0xff]
        %v800 = vld [vmem:[%s154 + $0x1358] sm:$0xff]
        %v801 = vld [vmem:[%s154 + $0x1360] sm:$0xff]
        %v802 = vld [vmem:[%s154 + $0x1368] sm:$0xff]
        %v803 = vld [vmem:[%s154 + $0x1370] sm:$0xff]
        %v804 = vld [vmem:[%s154 + $0x1378] sm:$0xff]
        %v805 = vld [vmem:[%s154 + $0x1380] sm:$0xff]
        %v806 = vld [vmem:[%s154 + $0x1388] sm:$0xff]
        %v807 = vld [vmem:[%s154 + $0x1390] sm:$0xff]
        %v808 = vld [vmem:[%s154 + $0x1398] sm:$0xff]
        %v809 = vld [vmem:[%s154 + $0x13a0] sm:$0xff]
        %v810 = vld [vmem:[%s154 + $0x13a8] sm:$0xff]
        %v811 = vld [vmem:[%s154 + $0x13b0] sm:$0xff]
        %v812 = vld [vmem:[%s154 + $0x13b8] sm:$0xff]
        %v813 = vld [vmem:[%s154 + $0x13c0] sm:$0xff]
        %v814 = vld [vmem:[%s154 + $0x13c8] sm:$0xff]
        %v815 = vld [vmem:[%s154 + $0x13d0] sm:$0xff]
        %v816 = vld [vmem:[%s154 + $0x13d8] sm:$0xff]
        %v817 = vld [vmem:[%s154 + $0x13e0] sm:$0xff]
        %v818 = vld [vmem:[%s154 + $0x13e8] sm:$0xff]
        %v819 = vld [vmem:[%s154 + $0x13f0] sm:$0xff]
        %v820 = vld [vmem:[%s154 + $0x13f8] sm:$0xff]
        %v821 = vld [vmem:[%s154 + $0x1400] sm:$0xff]
        %v822 = vld [vmem:[%s154 + $0x1408] sm:$0xff]
        %v823 = vld [vmem:[%s154 + $0x1410] sm:$0xff]
        %v824 = vld [vmem:[%s154 + $0x1418] sm:$0xff]
        %v825 = vld [vmem:[%s154 + $0x1420] sm:$0xff]
        %v826 = vld [vmem:[%s154 + $0x1428] sm:$0xff]
        %v827 = vld [vmem:[%s154 + $0x1430] sm:$0xff]
        %v828 = vld [vmem:[%s154 + $0x1438] sm:$0xff]
        %v829 = vld [vmem:[%s154 + $0x1440] sm:$0xff]
        %v830 = vld [vmem:[%s154 + $0x1448] sm:$0xff]
        %v831 = vld [vmem:[%s154 + $0x1450] sm:$0xff]
        %v832 = vld [vmem:[%s154 + $0x1458] sm:$0xff]
        %v833 = vld [vmem:[%s154 + $0x1460] sm:$0xff]
        %v834 = vld [vmem:[%s154 + $0x1468] sm:$0xff]
        %v835 = vld [vmem:[%s154 + $0x1470] sm:$0xff]
        %v836 = vld [vmem:[%s154 + $0x1478] sm:$0xff]
        %v837 = vld [vmem:[%s154 + $0x1480] sm:$0xff]
        %v838 = vld [vmem:[%s154 + $0x1488] sm:$0xff]
        %v839 = vld [vmem:[%s154 + $0x1490] sm:$0xff]
        %v840 = vld [vmem:[%s154 + $0x1498] sm:$0xff]
        %v841 = vld [vmem:[%s154 + $0x14a0] sm:$0xff]
        %v842 = vld [vmem:[%s154 + $0x14a8] sm:$0xff]
        %v843 = vld [vmem:[%s154 + $0x14b0] sm:$0xff]
        %v844 = vld [vmem:[%s154 + $0x14b8] sm:$0xff]
        %v845 = vld [vmem:[%s154 + $0x14c0] sm:$0xff]
        %v846 = vld [vmem:[%s154 + $0x14c8] sm:$0xff]
        %v847 = vld [vmem:[%s154 + $0x14d0] sm:$0xff]
        %v848 = vld [vmem:[%s154 + $0x14d8] sm:$0xff]
        %v849 = vld [vmem:[%s154 + $0x14e0] sm:$0xff]
        %v850 = vld [vmem:[%s154 + $0x14e8] sm:$0xff]
        %v851 = vld [vmem:[%s154 + $0x14f0] sm:$0xff]
        %v852 = vld [vmem:[%s154 + $0x14f8] sm:$0xff]
        %v853 = vld [vmem:[%s154 + $0x1500] sm:$0xff]
        %v854 = vld [vmem:[%s154 + $0x1508] sm:$0xff]
        %v855 = vld [vmem:[%s154 + $0x1510] sm:$0xff]
        %v856 = vld [vmem:[%s154 + $0x1518] sm:$0xff]
        %v857 = vld [vmem:[%s154 + $0x1520] sm:$0xff]
        %v858 = vld [vmem:[%s154 + $0x1528] sm:$0xff]
        %v859 = vld [vmem:[%s154 + $0x1530] sm:$0xff]
        %v860 = vld [vmem:[%s154 + $0x1538] sm:$0xff]
        %v861 = vld [vmem:[%s154 + $0x1540] sm:$0xff]
        %v862 = vld [vmem:[%s154 + $0x1548] sm:$0xff]
        %v863 = vld [vmem:[%s154 + $0x1550] sm:$0xff]
        %v864 = vld [vmem:[%s154 + $0x1558] sm:$0xff]
        %v865 = vld [vmem:[%s154 + $0x1560] sm:$0xff]
        %v866 = vld [vmem:[%s154 + $0x1568] sm:$0xff]
        %v867 = vld [vmem:[%s154 + $0x1570] sm:$0xff]
        %v868 = vld [vmem:[%s154 + $0x1578] sm:$0xff]
        %v869 = vld [vmem:[%s154 + $0x1580] sm:$0xff]
        %v870 = vld [vmem:[%s154 + $0x1588] sm:$0xff]
        %v871 = vld [vmem:[%s154 + $0x1590] sm:$0xff]
        %v872 = vld [vmem:[%s154 + $0x1598] sm:$0xff]
        %v873 = vld [vmem:[%s154 + $0x15a0] sm:$0xff]
        %v874 = vld [vmem:[%s154 + $0x15a8] sm:$0xff]
        %v875 = vld [vmem:[%s154 + $0x15b0] sm:$0xff]
        %v876 = vld [vmem:[%s154 + $0x15b8] sm:$0xff]
        %v877 = vld [vmem:[%s154 + $0x15c0] sm:$0xff]
        %v878 = vld [vmem:[%s154 + $0x15c8] sm:$0xff]
        %v879 = vld [vmem:[%s154 + $0x15d0] sm:$0xff]
        %v880 = vld [vmem:[%s154 + $0x15d8] sm:$0xff]
        %v881 = vld [vmem:[%s154 + $0x15e0] sm:$0xff]
        %v882 = vld [vmem:[%s154 + $0x15e8] sm:$0xff]
        %v883 = vld [vmem:[%s154 + $0x15f0] sm:$0xff]
        %v884 = vld [vmem:[%s154 + $0x15f8] sm:$0xff]
        %v885 = vld [vmem:[%s154 + $0x1600] sm:$0xff]
        %v886 = vld [vmem:[%s154 + $0x1608] sm:$0xff]
        %v887 = vld [vmem:[%s154 + $0x1610] sm:$0xff]
        %v888 = vld [vmem:[%s154 + $0x1618] sm:$0xff]
        %v889 = vld [vmem:[%s154 + $0x1620] sm:$0xff]
        %v890 = vld [vmem:[%s154 + $0x1628] sm:$0xff]
        %v891 = vld [vmem:[%s154 + $0x1630] sm:$0xff]
        %v892 = vld [vmem:[%s154 + $0x1638] sm:$0xff]
        %v893 = vld [vmem:[%s154 + $0x1640] sm:$0xff]
        %v894 = vld [vmem:[%s154 + $0x1648] sm:$0xff]
        %v895 = vld [vmem:[%s154 + $0x1650] sm:$0xff]
        %v896 = vld [vmem:[%s154 + $0x1658] sm:$0xff]
        %v897 = vld [vmem:[%s154 + $0x1660] sm:$0xff]
        %v898 = vld [vmem:[%s154 + $0x1668] sm:$0xff]
        %v899 = vld [vmem:[%s154 + $0x1670] sm:$0xff]
        %v900 = vld [vmem:[%s154 + $0x1678] sm:$0xff]
        %v901 = vld [vmem:[%s154 + $0x1680] sm:$0xff]
        %v902 = vld [vmem:[%s154 + $0x1688] sm:$0xff]
        %v903 = vld [vmem:[%s154 + $0x1690] sm:$0xff]
        %v904 = vld [vmem:[%s154 + $0x1698] sm:$0xff]
        %v905 = vld [vmem:[%s154 + $0x16a0] sm:$0xff]
        %v906 = vld [vmem:[%s154 + $0x16a8] sm:$0xff]
        %v907 = vld [vmem:[%s154 + $0x16b0] sm:$0xff]
        %v908 = vld [vmem:[%s154 + $0x16b8] sm:$0xff]
        %v909 = vld [vmem:[%s154 + $0x16c0] sm:$0xff]
        %v910 = vld [vmem:[%s154 + $0x16c8] sm:$0xff]
        %v911 = vld [vmem:[%s154 + $0x16d0] sm:$0xff]
        %v912 = vld [vmem:[%s154 + $0x16d8] sm:$0xff]
        %v913 = vld [vmem:[%s154 + $0x16e0] sm:$0xff]
        %v914 = vld [vmem:[%s154 + $0x16e8] sm:$0xff]
        %v915 = vld [vmem:[%s154 + $0x16f0] sm:$0xff]
        %v916 = vld [vmem:[%s154 + $0x16f8] sm:$0xff]
        %v917 = vld [vmem:[%s154 + $0x1700] sm:$0xff]
        %v918 = vld [vmem:[%s154 + $0x1708] sm:$0xff]
        %v919 = vld [vmem:[%s154 + $0x1710] sm:$0xff]
        %v920 = vld [vmem:[%s154 + $0x1718] sm:$0xff]
        %v921 = vld [vmem:[%s154 + $0x1720] sm:$0xff]
        %v922 = vld [vmem:[%s154 + $0x1728] sm:$0xff]
        %v923 = vld [vmem:[%s154 + $0x1730] sm:$0xff]
        %v924 = vld [vmem:[%s154 + $0x1738] sm:$0xff]
        %v925 = vld [vmem:[%s154 + $0x1740] sm:$0xff]
        %v926 = vld [vmem:[%s154 + $0x1748] sm:$0xff]
        %v927 = vld [vmem:[%s154 + $0x1750] sm:$0xff]
        %v928 = vld [vmem:[%s154 + $0x1758] sm:$0xff]
        %v929 = vld [vmem:[%s154 + $0x1760] sm:$0xff]
        %v930 = vld [vmem:[%s154 + $0x1768] sm:$0xff]
        %v931 = vld [vmem:[%s154 + $0x1770] sm:$0xff]
        %v932 = vld [vmem:[%s154 + $0x1778] sm:$0xff]
        %v933 = vld [vmem:[%s154 + $0x1780] sm:$0xff]
        %v934 = vld [vmem:[%s154 + $0x1788] sm:$0xff]
        %v935 = vld [vmem:[%s154 + $0x1790] sm:$0xff]
        %v936 = vld [vmem:[%s154 + $0x1798] sm:$0xff]
        %v937 = vld [vmem:[%s154 + $0x17a0] sm:$0xff]
        %v938 = vld [vmem:[%s154 + $0x17a8] sm:$0xff]
        %v939 = vld [vmem:[%s154 + $0x17b0] sm:$0xff]
        %v940 = vld [vmem:[%s154 + $0x17b8] sm:$0xff]
        %v941 = vld [vmem:[%s154 + $0x17c0] sm:$0xff]
        %v942 = vld [vmem:[%s154 + $0x17c8] sm:$0xff]
        %v943 = vld [vmem:[%s154 + $0x17d0] sm:$0xff]
        %v944 = vld [vmem:[%s154 + $0x17d8] sm:$0xff]
        %v945 = vld [vmem:[%s154 + $0x17e0] sm:$0xff]
        %v946 = vld [vmem:[%s154 + $0x17e8] sm:$0xff]
        %v947 = vld [vmem:[%s154 + $0x17f0] sm:$0xff]
        %v948 = vld [vmem:[%s154 + $0x17f8] sm:$0xff]
        %v949 = vld [vmem:[%s154 + $0x1800] sm:$0xff]
        %v950 = vld [vmem:[%s154 + $0x1808] sm:$0xff]
        %v951 = vld [vmem:[%s154 + $0x1810] sm:$0xff]
        %v952 = vld [vmem:[%s154 + $0x1818] sm:$0xff]
        %v953 = vld [vmem:[%s154 + $0x1820] sm:$0xff]
        %v954 = vld [vmem:[%s154 + $0x1828] sm:$0xff]
        %v955 = vld [vmem:[%s154 + $0x1830] sm:$0xff]
        %v956 = vld [vmem:[%s154 + $0x1838] sm:$0xff]
        %v957 = vld [vmem:[%s154 + $0x1840] sm:$0xff]
        %v958 = vld [vmem:[%s154 + $0x1848] sm:$0xff]
        %v959 = vld [vmem:[%s154 + $0x1850] sm:$0xff]
        %v960 = vld [vmem:[%s154 + $0x1858] sm:$0xff]
        %v961 = vld [vmem:[%s154 + $0x1860] sm:$0xff]
        %v962 = vld [vmem:[%s154 + $0x1868] sm:$0xff]
        %v963 = vld [vmem:[%s154 + $0x1870] sm:$0xff]
        %v964 = vld [vmem:[%s154 + $0x1878] sm:$0xff]
        %v965 = vld [vmem:[%s154 + $0x1880] sm:$0xff]
        %v966 = vld [vmem:[%s154 + $0x1888] sm:$0xff]
        %v967 = vld [vmem:[%s154 + $0x1890] sm:$0xff]
        %v968 = vld [vmem:[%s154 + $0x1898] sm:$0xff]
        %v969 = vld [vmem:[%s154 + $0x18a0] sm:$0xff]
        %v970 = vld [vmem:[%s154 + $0x18a8] sm:$0xff]
        %v971 = vld [vmem:[%s154 + $0x18b0] sm:$0xff]
        %v972 = vld [vmem:[%s154 + $0x18b8] sm:$0xff]
        %v973 = vld [vmem:[%s154 + $0x18c0] sm:$0xff]
        %v974 = vld [vmem:[%s154 + $0x18c8] sm:$0xff]
        %v975 = vld [vmem:[%s154 + $0x18d0] sm:$0xff]
        %v976 = vld [vmem:[%s154 + $0x18d8] sm:$0xff]
        %v977 = vld [vmem:[%s154 + $0x18e0] sm:$0xff]
        %v978 = vld [vmem:[%s154 + $0x18e8] sm:$0xff]
        %v979 = vld [vmem:[%s154 + $0x18f0] sm:$0xff]
        %v980 = vld [vmem:[%s154 + $0x18f8] sm:$0xff]
        %v981 = vld [vmem:[%s154 + $0x1900] sm:$0xff]
        %v982 = vld [vmem:[%s154 + $0x1908] sm:$0xff]
        %v983 = vld [vmem:[%s154 + $0x1910] sm:$0xff]
        %v984 = vld [vmem:[%s154 + $0x1918] sm:$0xff]
        %v985 = vld [vmem:[%s154 + $0x1920] sm:$0xff]
        %v986 = vld [vmem:[%s154 + $0x1928] sm:$0xff]
        %v987 = vld [vmem:[%s154 + $0x1930] sm:$0xff]
        %v988 = vld [vmem:[%s154 + $0x1938] sm:$0xff]
        %v989 = vld [vmem:[%s154 + $0x1940] sm:$0xff]
        %v990 = vld [vmem:[%s154 + $0x1948] sm:$0xff]
        %v991 = vld [vmem:[%s154 + $0x1950] sm:$0xff]
        %v992 = vld [vmem:[%s154 + $0x1958] sm:$0xff]
        %v993 = vld [vmem:[%s154 + $0x1960] sm:$0xff]
        %v994 = vld [vmem:[%s154 + $0x1968] sm:$0xff]
        %v995 = vld [vmem:[%s154 + $0x1970] sm:$0xff]
        %v996 = vld [vmem:[%s154 + $0x1978] sm:$0xff]
        %v997 = vld [vmem:[%s154 + $0x1980] sm:$0xff]
        %v998 = vld [vmem:[%s154 + $0x1988] sm:$0xff]
        %v999 = vld [vmem:[%s154 + $0x1990] sm:$0xff]
        %v1000 = vld [vmem:[%s154 + $0x1998] sm:$0xff]
        %v1001 = vld [vmem:[%s154 + $0x19a0] sm:$0xff]
        %v1002 = vld [vmem:[%s154 + $0x19a8] sm:$0xff]
        %v1003 = vld [vmem:[%s154 + $0x19b0] sm:$0xff]
        %v1004 = vld [vmem:[%s154 + $0x19b8] sm:$0xff]
        %v1005 = vld [vmem:[%s154 + $0x19c0] sm:$0xff]
        %v1006 = vld [vmem:[%s154 + $0x19c8] sm:$0xff]
        %v1007 = vld [vmem:[%s154 + $0x19d0] sm:$0xff]
        %v1008 = vld [vmem:[%s154 + $0x19d8] sm:$0xff]
        %v1009 = vld [vmem:[%s154 + $0x19e0] sm:$0xff]
        %v1010 = vld [vmem:[%s154 + $0x19e8] sm:$0xff]
        %v1011 = vld [vmem:[%s154 + $0x19f0] sm:$0xff]
        %v1012 = vld [vmem:[%s154 + $0x19f8] sm:$0xff]
        %v1013 = vld [vmem:[%s154 + $0x1a00] sm:$0xff]
        %v1014 = vld [vmem:[%s154 + $0x1a08] sm:$0xff]
        %v1015 = vld [vmem:[%s154 + $0x1a10] sm:$0xff]
        %v1016 = vld [vmem:[%s154 + $0x1a18] sm:$0xff]
        %v1017 = vld [vmem:[%s154 + $0x1a20] sm:$0xff]
        %v1018 = vld [vmem:[%s154 + $0x1a28] sm:$0xff]
        %v1019 = vld [vmem:[%s154 + $0x1a30] sm:$0xff]
        %v1020 = vld [vmem:[%s154 + $0x1a38] sm:$0xff]
        %v1021 = vld [vmem:[%s154 + $0x1a40] sm:$0xff]
        %v1022 = vld [vmem:[%s154 + $0x1a48] sm:$0xff]
        %v1023 = vld [vmem:[%s154 + $0x1a50] sm:$0xff]
        %v1024 = vld [vmem:[%s154 + $0x1a58] sm:$0xff]
        %v1025 = vld [vmem:[%s154 + $0x1a60] sm:$0xff]
        %v1026 = vld [vmem:[%s154 + $0x1a68] sm:$0xff]
        %v1027 = vld [vmem:[%s154 + $0x1a70] sm:$0xff]
        %v1028 = vld [vmem:[%s154 + $0x1a78] sm:$0xff]
        %v1029 = vld [vmem:[%s154 + $0x1a80] sm:$0xff]
        %v1030 = vld [vmem:[%s154 + $0x1a88] sm:$0xff]
        %v1031 = vld [vmem:[%s154 + $0x1a90] sm:$0xff]
        %v1032 = vld [vmem:[%s154 + $0x1a98] sm:$0xff]
        %v1033 = vld [vmem:[%s154 + $0x1aa0] sm:$0xff]
        %v1034 = vld [vmem:[%s154 + $0x1aa8] sm:$0xff]
        %v1035 = vld [vmem:[%s154 + $0x1ab0] sm:$0xff]
        %v1036 = vld [vmem:[%s154 + $0x1ab8] sm:$0xff]
        %v1037 = vld [vmem:[%s154 + $0x1ac0] sm:$0xff]
        %v1038 = vld [vmem:[%s154 + $0x1ac8] sm:$0xff]
        %v1039 = vld [vmem:[%s154 + $0x1ad0] sm:$0xff]
        %v1040 = vld [vmem:[%s154 + $0x1ad8] sm:$0xff]
        %v1041 = vld [vmem:[%s154 + $0x1ae0] sm:$0xff]
        %v1042 = vld [vmem:[%s154 + $0x1ae8] sm:$0xff]
        %v1043 = vld [vmem:[%s154 + $0x1af0] sm:$0xff]
        %v1044 = vld [vmem:[%s154 + $0x1af8] sm:$0xff]
        %v1045 = vld [vmem:[%s154 + $0x1b00] sm:$0xff]
        %v1046 = vld [vmem:[%s154 + $0x1b08] sm:$0xff]
        %v1047 = vld [vmem:[%s154 + $0x1b10] sm:$0xff]
        %v1048 = vld [vmem:[%s154 + $0x1b18] sm:$0xff]
        %v1049 = vld [vmem:[%s154 + $0x1b20] sm:$0xff]
        %v1050 = vld [vmem:[%s154 + $0x1b28] sm:$0xff]
        %v1051 = vld [vmem:[%s154 + $0x1b30] sm:$0xff]
        %v1052 = vld [vmem:[%s154 + $0x1b38] sm:$0xff]
        %v1053 = vld [vmem:[%s154 + $0x1b40] sm:$0xff]
        %v1054 = vld [vmem:[%s154 + $0x1b48] sm:$0xff]
        %v1055 = vld [vmem:[%s154 + $0x1b50] sm:$0xff]
        %v1056 = vld [vmem:[%s154 + $0x1b58] sm:$0xff]
        %v1057 = vld [vmem:[%s154 + $0x1b60] sm:$0xff]
        %v1058 = vld [vmem:[%s154 + $0x1b68] sm:$0xff]
        %v1059 = vld [vmem:[%s154 + $0x1b70] sm:$0xff]
        %v1060 = vld [vmem:[%s154 + $0x1b78] sm:$0xff]
        %v1061 = vld [vmem:[%s154 + $0x1b80] sm:$0xff]
        %v1062 = vld [vmem:[%s154 + $0x1b88] sm:$0xff]
        %v1063 = vld [vmem:[%s154 + $0x1b90] sm:$0xff]
        %v1064 = vld [vmem:[%s154 + $0x1b98] sm:$0xff]
        %v1065 = vld [vmem:[%s154 + $0x1ba0] sm:$0xff]
        %v1066 = vld [vmem:[%s154 + $0x1ba8] sm:$0xff]
        %v1067 = vld [vmem:[%s154 + $0x1bb0] sm:$0xff]
        %v1068 = vld [vmem:[%s154 + $0x1bb8] sm:$0xff]
        %v1069 = vld [vmem:[%s154 + $0x1bc0] sm:$0xff]
        %v1070 = vld [vmem:[%s154 + $0x1bc8] sm:$0xff]
        %v1071 = vld [vmem:[%s154 + $0x1bd0] sm:$0xff]
        %v1072 = vld [vmem:[%s154 + $0x1bd8] sm:$0xff]
        %v1073 = vld [vmem:[%s154 + $0x1be0] sm:$0xff]
        %v1074 = vld [vmem:[%s154 + $0x1be8] sm:$0xff]
        %v1075 = vld [vmem:[%s154 + $0x1bf0] sm:$0xff]
        %v1076 = vld [vmem:[%s154 + $0x1bf8] sm:$0xff]
        %v1077 = vld [vmem:[%s154 + $0x1c00] sm:$0xff]
        %v1078 = vld [vmem:[%s154 + $0x1c08] sm:$0xff]
        %v1079 = vld [vmem:[%s154 + $0x1c10] sm:$0xff]
        %v1080 = vld [vmem:[%s154 + $0x1c18] sm:$0xff]
        %v1081 = vld [vmem:[%s154 + $0x1c20] sm:$0xff]
        %v1082 = vld [vmem:[%s154 + $0x1c28] sm:$0xff]
        %v1083 = vld [vmem:[%s154 + $0x1c30] sm:$0xff]
        %v1084 = vld [vmem:[%s154 + $0x1c38] sm:$0xff]
        %v1085 = vld [vmem:[%s154 + $0x1c40] sm:$0xff]
        %v1086 = vld [vmem:[%s154 + $0x1c48] sm:$0xff]
        %v1087 = vld [vmem:[%s154 + $0x1c50] sm:$0xff]
        %v1088 = vld [vmem:[%s154 + $0x1c58] sm:$0xff]
        %v1089 = vld [vmem:[%s154 + $0x1c60] sm:$0xff]
        %v1090 = vld [vmem:[%s154 + $0x1c68] sm:$0xff]
        %v1091 = vld [vmem:[%s154 + $0x1c70] sm:$0xff]
        %v1092 = vld [vmem:[%s154 + $0x1c78] sm:$0xff]
        %v1093 = vld [vmem:[%s154 + $0x1c80] sm:$0xff]
        %v1094 = vld [vmem:[%s154 + $0x1c88] sm:$0xff]
        %v1095 = vld [vmem:[%s154 + $0x1c90] sm:$0xff]
        %v1096 = vld [vmem:[%s154 + $0x1c98] sm:$0xff]
        %v1097 = vld [vmem:[%s154 + $0x1ca0] sm:$0xff]
        %v1098 = vld [vmem:[%s154 + $0x1ca8] sm:$0xff]
        %v1099 = vld [vmem:[%s154 + $0x1cb0] sm:$0xff]
        %v1100 = vld [vmem:[%s154 + $0x1cb8] sm:$0xff]
        %v1101 = vld [vmem:[%s154 + $0x1cc0] sm:$0xff]
        %v1102 = vld [vmem:[%s154 + $0x1cc8] sm:$0xff]
        %v1103 = vld [vmem:[%s154 + $0x1cd0] sm:$0xff]
        %v1104 = vld [vmem:[%s154 + $0x1cd8] sm:$0xff]
        %v1105 = vld [vmem:[%s154 + $0x1ce0] sm:$0xff]
        %v1106 = vld [vmem:[%s154 + $0x1ce8] sm:$0xff]
        %v1107 = vld [vmem:[%s154 + $0x1cf0] sm:$0xff]
        %v1108 = vld [vmem:[%s154 + $0x1cf8] sm:$0xff]
        %v1109 = vld [vmem:[%s154 + $0x1d00] sm:$0xff]
        %v1110 = vld [vmem:[%s154 + $0x1d08] sm:$0xff]
        %v1111 = vld [vmem:[%s154 + $0x1d10] sm:$0xff]
        %v1112 = vld [vmem:[%s154 + $0x1d18] sm:$0xff]
        %v1113 = vld [vmem:[%s154 + $0x1d20] sm:$0xff]
        %v1114 = vld [vmem:[%s154 + $0x1d28] sm:$0xff]
        %v1115 = vld [vmem:[%s154 + $0x1d30] sm:$0xff]
        %v1116 = vld [vmem:[%s154 + $0x1d38] sm:$0xff]
        %v1117 = vld [vmem:[%s154 + $0x1d40] sm:$0xff]
        %v1118 = vld [vmem:[%s154 + $0x1d48] sm:$0xff]
        %v1119 = vld [vmem:[%s154 + $0x1d50] sm:$0xff]
        %v1120 = vld [vmem:[%s154 + $0x1d58] sm:$0xff]
        %v1121 = vld [vmem:[%s154 + $0x1d60] sm:$0xff]
        %v1122 = vld [vmem:[%s154 + $0x1d68] sm:$0xff]
        %v1123 = vld [vmem:[%s154 + $0x1d70] sm:$0xff]
        %v1124 = vld [vmem:[%s154 + $0x1d78] sm:$0xff]
        %v1125 = vld [vmem:[%s154 + $0x1d80] sm:$0xff]
        %v1126 = vld [vmem:[%s154 + $0x1d88] sm:$0xff]
        %v1127 = vld [vmem:[%s154 + $0x1d90] sm:$0xff]
        %v1128 = vld [vmem:[%s154 + $0x1d98] sm:$0xff]
        %v1129 = vld [vmem:[%s154 + $0x1da0] sm:$0xff]
        %v1130 = vld [vmem:[%s154 + $0x1da8] sm:$0xff]
        %v1131 = vld [vmem:[%s154 + $0x1db0] sm:$0xff]
        %v1132 = vld [vmem:[%s154 + $0x1db8] sm:$0xff]
        %v1133 = vld [vmem:[%s154 + $0x1dc0] sm:$0xff]
        %v1134 = vld [vmem:[%s154 + $0x1dc8] sm:$0xff]
        %v1135 = vld [vmem:[%s154 + $0x1dd0] sm:$0xff]
        %v1136 = vld [vmem:[%s154 + $0x1dd8] sm:$0xff]
        %v1137 = vld [vmem:[%s154 + $0x1de0] sm:$0xff]
        %v1138 = vld [vmem:[%s154 + $0x1de8] sm:$0xff]
        %v1139 = vld [vmem:[%s154 + $0x1df0] sm:$0xff]
        %v1140 = vld [vmem:[%s154 + $0x1df8] sm:$0xff]
        %v1141 = vld [vmem:[%s154 + $0x1e00] sm:$0xff]
        %v1142 = vld [vmem:[%s154 + $0x1e08] sm:$0xff]
        %v1143 = vld [vmem:[%s154 + $0x1e10] sm:$0xff]
        %v1144 = vld [vmem:[%s154 + $0x1e18] sm:$0xff]
        %v1145 = vld [vmem:[%s154 + $0x1e20] sm:$0xff]
        %v1146 = vld [vmem:[%s154 + $0x1e28] sm:$0xff]
        %v1147 = vld [vmem:[%s154 + $0x1e30] sm:$0xff]
        %v1148 = vld [vmem:[%s154 + $0x1e38] sm:$0xff]
        %v1149 = vld [vmem:[%s154 + $0x1e40] sm:$0xff]
        %v1150 = vld [vmem:[%s154 + $0x1e48] sm:$0xff]
        %v1151 = vld [vmem:[%s154 + $0x1e50] sm:$0xff]
        %v1152 = vld [vmem:[%s154 + $0x1e58] sm:$0xff]
        %v1153 = vld [vmem:[%s154 + $0x1e60] sm:$0xff]
        %v1154 = vld [vmem:[%s154 + $0x1e68] sm:$0xff]
        %v1155 = vld [vmem:[%s154 + $0x1e70] sm:$0xff]
        %v1156 = vld [vmem:[%s154 + $0x1e78] sm:$0xff]
        %v1157 = vld [vmem:[%s154 + $0x1e80] sm:$0xff]
        %v1158 = vld [vmem:[%s154 + $0x1e88] sm:$0xff]
        %v1159 = vld [vmem:[%s154 + $0x1e90] sm:$0xff]
        %v1160 = vld [vmem:[%s154 + $0x1e98] sm:$0xff]
        %v1161 = vld [vmem:[%s154 + $0x1ea0] sm:$0xff]
        %v1162 = vld [vmem:[%s154 + $0x1ea8] sm:$0xff]
        %v1163 = vld [vmem:[%s154 + $0x1eb0] sm:$0xff]
        %v1164 = vld [vmem:[%s154 + $0x1eb8] sm:$0xff]
        %v1165 = vld [vmem:[%s154 + $0x1ec0] sm:$0xff]
        %v1166 = vld [vmem:[%s154 + $0x1ec8] sm:$0xff]
        %v1167 = vld [vmem:[%s154 + $0x1ed0] sm:$0xff]
        %v1168 = vld [vmem:[%s154 + $0x1ed8] sm:$0xff]
        %v1169 = vld [vmem:[%s154 + $0x1ee0] sm:$0xff]
        %v1170 = vld [vmem:[%s154 + $0x1ee8] sm:$0xff]
        %v1171 = vld [vmem:[%s154 + $0x1ef0] sm:$0xff]
        %v1172 = vld [vmem:[%s154 + $0x1ef8] sm:$0xff]
        %v1173 = vld [vmem:[%s154 + $0x1f00] sm:$0xff]
        %v1174 = vld [vmem:[%s154 + $0x1f08] sm:$0xff]
        %v1175 = vld [vmem:[%s154 + $0x1f10] sm:$0xff]
        %v1176 = vld [vmem:[%s154 + $0x1f18] sm:$0xff]
        %v1177 = vld [vmem:[%s154 + $0x1f20] sm:$0xff]
        %v1178 = vld [vmem:[%s154 + $0x1f28] sm:$0xff]
        %v1179 = vld [vmem:[%s154 + $0x1f30] sm:$0xff]
        %v1180 = vld [vmem:[%s154 + $0x1f38] sm:$0xff]
        %v1181 = vld [vmem:[%s154 + $0x1f40] sm:$0xff]
        %v1182 = vld [vmem:[%s154 + $0x1f48] sm:$0xff]
        %v1183 = vld [vmem:[%s154 + $0x1f50] sm:$0xff]
        %v1184 = vld [vmem:[%s154 + $0x1f58] sm:$0xff]
        %v1185 = vld [vmem:[%s154 + $0x1f60] sm:$0xff]
        %v1186 = vld [vmem:[%s154 + $0x1f68] sm:$0xff]
        %v1187 = vld [vmem:[%s154 + $0x1f70] sm:$0xff]
        %v1188 = vld [vmem:[%s154 + $0x1f78] sm:$0xff]
        %v1189 = vld [vmem:[%s154 + $0x1f80] sm:$0xff]
        %v1190 = vld [vmem:[%s154 + $0x1f88] sm:$0xff]
        %v1191 = vld [vmem:[%s154 + $0x1f90] sm:$0xff]
        %v1192 = vld [vmem:[%s154 + $0x1f98] sm:$0xff]
        %v1193 = vld [vmem:[%s154 + $0x1fa0] sm:$0xff]
        %v1194 = vld [vmem:[%s154 + $0x1fa8] sm:$0xff]
        %v1195 = vld [vmem:[%s154 + $0x1fb0] sm:$0xff]
        %v1196 = vld [vmem:[%s154 + $0x1fb8] sm:$0xff]
        %v1197 = vld [vmem:[%s154 + $0x1fc0] sm:$0xff]
        %v1198 = vld [vmem:[%s154 + $0x1fc8] sm:$0xff]
        %v1199 = vld [vmem:[%s154 + $0x1fd0] sm:$0xff]
        %v1200 = vld [vmem:[%s154 + $0x1fd8] sm:$0xff]
        %v1201 = vld [vmem:[%s154 + $0x1fe0] sm:$0xff]
        %v1202 = vld [vmem:[%s154 + $0x1fe8] sm:$0xff]
        %v1203 = vld [vmem:[%s154 + $0x1ff0] sm:$0xff]
        %v1204 = vld [vmem:[%s154 + $0x1ff8] sm:$0xff]
        %v1205 = vld [vmem:[%s154 + $0x2000] sm:$0xff]
        %v1206 = vld [vmem:[%s154 + $0x2008] sm:$0xff]
        %v1207 = vld [vmem:[%s154 + $0x2010] sm:$0xff]
        %v1208 = vld [vmem:[%s154 + $0x2018] sm:$0xff]
        %v1209 = vld [vmem:[%s154 + $0x2020] sm:$0xff]
        %v1210 = vld [vmem:[%s154 + $0x2028] sm:$0xff]
        %v1211 = vld [vmem:[%s154 + $0x2030] sm:$0xff]
        %v1212 = vld [vmem:[%s154 + $0x2038] sm:$0xff]
        %v1213 = vld [vmem:[%s154 + $0x2040] sm:$0xff]
        %v1214 = vld [vmem:[%s154 + $0x2048] sm:$0xff]
        %v1215 = vld [vmem:[%s154 + $0x2050] sm:$0xff]
        %v1216 = vld [vmem:[%s154 + $0x2058] sm:$0xff]
        %v1217 = vld [vmem:[%s154 + $0x2060] sm:$0xff]
        %v1218 = vld [vmem:[%s154 + $0x2068] sm:$0xff]
        %v1219 = vld [vmem:[%s154 + $0x2070] sm:$0xff]
        %v1220 = vld [vmem:[%s154 + $0x2078] sm:$0xff]
        %v1225 = vcombine.high %v177, %v177
        %v1227 = vunpack.c.l.s4 1983009808
        %v1228 = vunpack.c.0.s8 %v1227
        %v1229 = vlaneseq
        %v1230 = vshrl.u32 %v1229, 7
        %v1231 = vsub.s32 %v1228, %v1230
        %v1232 = vrot.slane %v177, %v1231
        %v1234 = vunpack.c.l.s4 1983009808
        %v1235 = vunpack.c.0.s8 %v1234
        %v1236 = vlaneseq
        %v1237 = vshrl.u32 %v1236, 7
        %v1238 = vsub.s32 %v1235, %v1237
        %v1239 = vrot.slane %v1225, %v1238
        %v1240 = vcombine.high %v1232, %v1232
        %v1241 = vcombine.high %v1239, %v1239
        %v1242 = vcombine.high %v178, %v178
        %v1244 = vunpack.c.l.s4 1983009808
        %v1245 = vunpack.c.0.s8 %v1244
        %v1246 = vlaneseq
        %v1247 = vshrl.u32 %v1246, 7
        %v1248 = vsub.s32 %v1245, %v1247
        %v1249 = vrot.slane %v178, %v1248
        %v1251 = vunpack.c.l.s4 1983009808
        %v1252 = vunpack.c.0.s8 %v1251
        %v1253 = vlaneseq
        %v1254 = vshrl.u32 %v1253, 7
        %v1255 = vsub.s32 %v1252, %v1254
        %v1256 = vrot.slane %v1242, %v1255
        %v1257 = vcombine.high %v1249, %v1249
        %v1258 = vcombine.high %v1256, %v1256
        %v1259 = vcombine.high %v179, %v179
        %v1261 = vunpack.c.l.s4 1983009808
        %v1262 = vunpack.c.0.s8 %v1261
        %v1263 = vlaneseq
        %v1264 = vshrl.u32 %v1263, 7
        %v1265 = vsub.s32 %v1262, %v1264
        %v1266 = vrot.slane %v179, %v1265
        %v1268 = vunpack.c.l.s4 1983009808
        %v1269 = vunpack.c.0.s8 %v1268
        %v1270 = vlaneseq
        %v1271 = vshrl.u32 %v1270, 7
        %v1272 = vsub.s32 %v1269, %v1271
        %v1273 = vrot.slane %v1259, %v1272
        %v1274 = vcombine.high %v1266, %v1266
        %v1275 = vcombine.high %v1273, %v1273
        %v1277 = vunpack.c.l.s4 1983009808
        %v1278 = vunpack.c.0.s8 %v1277
        %v1279 = vlaneseq
        %v1280 = vshrl.u32 %v1279, 7
        %v1281 = vsub.s32 %v1278, %v1280
        %v1282 = vrot.slane %v180, %v1281
        %1296 = vmatprep.subr.mxu0 %v257
        %1297 = vmatpush1.msra.mxu0 %v256
        %1298 = vmatprep.subr.mxu0 %v252
        %1299 = vmatpush1.msra.mxu0 %v251
        %1300 = vmatprep.subr.mxu0 %v247
        %1301 = vmatpush1.msra.mxu0 %v246
        %1302 = vmatprep.subr.mxu0 %v242
        %1303 = vmatpush1.msra.mxu0 %v241
        %1304 = vmatprep.subr.mxu0 %v237
        %1305 = vmatpush1.msra.mxu0 %v236
        %1306 = vmatprep.subr.mxu0 %v232
        %1307 = vmatpush1.msra.mxu0 %v231
        %1308 = vmatprep.subr.mxu0 %v227
        %1309 = vmatpush1.msra.mxu0 %v226
        %1310 = vmatprep.subr.mxu0 %v222
        %1311 = vmatpush1.msra.mxu0 %v221
        %1312 = vmatprep.subr.mxu0 %v217
        %1313 = vmatpush1.msra.mxu0 %v216
        %1314 = vmatprep.subr.mxu0 %v212
        %1315 = vmatpush1.msra.mxu0 %v211
        %1316 = vmatprep.subr.mxu0 %v207
        %1317 = vmatpush1.msra.mxu0 %v206
        %1318 = vmatprep.subr.mxu0 %v202
        %1319 = vmatpush1.msra.mxu0 %v201
        %1320 = vmatprep.subr.mxu0 %v197
        %1321 = vmatpush1.msra.mxu0 %v196
        %1322 = vmatprep.subr.mxu0 %v192
        %1323 = vmatpush1.msra.mxu0 %v191
        %1324 = vmatprep.subr.mxu0 %v187
        %1325 = vmatpush1.msra.mxu0 %v186
        %1326 = vmatprep.subr.mxu0 %v182
        %1327 = vmatpush1.msra.mxu0 %v181
        %1328 = vmatprep.subr.mxu0 %v337
        %1329 = vmatpush2.msra.mxu0 %v336
        %1330 = vmatprep.subr.mxu0 %v332
        %1331 = vmatpush2.msra.mxu0 %v331
        %1332 = vmatprep.subr.mxu0 %v327
        %1333 = vmatpush2.msra.mxu0 %v326
        %1334 = vmatprep.subr.mxu0 %v322
        %1335 = vmatpush2.msra.mxu0 %v321
        %1336 = vmatprep.subr.mxu0 %v317
        %1337 = vmatpush2.msra.mxu0 %v316
        %1338 = vmatprep.subr.mxu0 %v312
        %1339 = vmatpush2.msra.mxu0 %v311
        %1340 = vmatprep.subr.mxu0 %v307
        %1341 = vmatpush2.msra.mxu0 %v306
        %1342 = vmatprep.subr.mxu0 %v302
        %1343 = vmatpush2.msra.mxu0 %v301
        %1344 = vmatprep.subr.mxu0 %v297
        %1345 = vmatpush2.msra.mxu0 %v296
        %1346 = vmatprep.subr.mxu0 %v292
        %1347 = vmatpush2.msra.mxu0 %v291
        %1348 = vmatprep.subr.mxu0 %v287
        %1349 = vmatpush2.msra.mxu0 %v286
        %1350 = vmatprep.subr.mxu0 %v282
        %1351 = vmatpush2.msra.mxu0 %v281
        %1352 = vmatprep.subr.mxu0 %v277
        %1353 = vmatpush2.msra.mxu0 %v276
        %1354 = vmatprep.subr.mxu0 %v272
        %1355 = vmatpush2.msra.mxu0 %v271
        %1356 = vmatprep.subr.mxu0 %v267
        %1357 = vmatpush2.msra.mxu0 %v266
        %1358 = vmatprep.subr.mxu0 %v262
        %1359 = vmatpush2.msra.mxu0 %v261
        %1360 = vmatprep.mubr.f32.mxu0 %v1240
        %1361 = vmatmul.mubr.f32.gmra.mxu0 %v1232
        %v1362 = vpop.f32.mrf.mxu0
        %v1363 = vadd.f32 0.0, %v1362
        %v1364 = vpop.f32.mrf.mxu0
        %v1365 = vadd.f32 0.0, %v1364
        %1366 = vdwg.mxu0
        %1367 = vmatprep.subr.mxu0 %v417
        %1368 = vmatpush1.msra.mxu0 %v416
        %1369 = vmatprep.subr.mxu0 %v412
        %1370 = vmatpush1.msra.mxu0 %v411
        %1371 = vmatprep.subr.mxu0 %v407
        %1372 = vmatpush1.msra.mxu0 %v406
        %1373 = vmatprep.subr.mxu0 %v402
        %1374 = vmatpush1.msra.mxu0 %v401
        %1375 = vmatprep.subr.mxu0 %v397
        %1376 = vmatpush1.msra.mxu0 %v396
        %1377 = vmatprep.subr.mxu0 %v392
        %1378 = vmatpush1.msra.mxu0 %v391
        %1379 = vmatprep.subr.mxu0 %v387
        %1380 = vmatpush1.msra.mxu0 %v386
        %1381 = vmatprep.subr.mxu0 %v382
        %1382 = vmatpush1.msra.mxu0 %v381
        %1383 = vmatprep.subr.mxu0 %v377
        %1384 = vmatpush1.msra.mxu0 %v376
        %1385 = vmatprep.subr.mxu0 %v372
        %1386 = vmatpush1.msra.mxu0 %v371
        %1387 = vmatprep.subr.mxu0 %v367
        %1388 = vmatpush1.msra.mxu0 %v366
        %1389 = vmatprep.subr.mxu0 %v362
        %1390 = vmatpush1.msra.mxu0 %v361
        %1391 = vmatprep.subr.mxu0 %v357
        %1392 = vmatpush1.msra.mxu0 %v356
        %1393 = vmatprep.subr.mxu0 %v352
        %1394 = vmatpush1.msra.mxu0 %v351
        %1395 = vmatprep.subr.mxu0 %v347
        %1396 = vmatpush1.msra.mxu0 %v346
        %1397 = vmatprep.subr.mxu0 %v342
        %1398 = vmatpush1.msra.mxu0 %v341
        %1399 = vmatprep.subr.mxu0 %v497
        %1400 = vmatpush2.msra.mxu0 %v496
        %1401 = vmatprep.subr.mxu0 %v492
        %1402 = vmatpush2.msra.mxu0 %v491
        %1403 = vmatprep.subr.mxu0 %v487
        %1404 = vmatpush2.msra.mxu0 %v486
        %1405 = vmatprep.subr.mxu0 %v482
        %1406 = vmatpush2.msra.mxu0 %v481
        %1407 = vmatprep.subr.mxu0 %v477
        %1408 = vmatpush2.msra.mxu0 %v476
        %1409 = vmatprep.subr.mxu0 %v472
        %1410 = vmatpush2.msra.mxu0 %v471
        %1411 = vmatprep.subr.mxu0 %v467
        %1412 = vmatpush2.msra.mxu0 %v466
        %1413 = vmatprep.subr.mxu0 %v462
        %1414 = vmatpush2.msra.mxu0 %v461
        %1415 = vmatprep.subr.mxu0 %v457
        %1416 = vmatpush2.msra.mxu0 %v456
        %1417 = vmatprep.subr.mxu0 %v452
        %1418 = vmatpush2.msra.mxu0 %v451
        %1419 = vmatprep.subr.mxu0 %v447
        %1420 = vmatpush2.msra.mxu0 %v446
        %1421 = vmatprep.subr.mxu0 %v442
        %1422 = vmatpush2.msra.mxu0 %v441
        %1423 = vmatprep.subr.mxu0 %v437
        %1424 = vmatpush2.msra.mxu0 %v436
        %1425 = vmatprep.subr.mxu0 %v432
        %1426 = vmatpush2.msra.mxu0 %v431
        %1427 = vmatprep.subr.mxu0 %v427
        %1428 = vmatpush2.msra.mxu0 %v426
        %1429 = vmatprep.subr.mxu0 %v422
        %1430 = vmatpush2.msra.mxu0 %v421
        %1431 = vmatprep.mubr.f32.mxu0 %v1241
        %1432 = vmatmul.mubr.f32.gmra.mxu0 %v1239
        %v1433 = vpop.f32.mrf.mxu0
        %v1434 = vadd.f32 %v1363, %v1433
        %v1435 = vpop.f32.mrf.mxu0
        %v1436 = vadd.f32 %v1365, %v1435
        %1437 = vdwg.mxu0
        %1438 = vmatprep.subr.mxu0 %v577
        %1439 = vmatpush1.msra.mxu0 %v576
        %1440 = vmatprep.subr.mxu0 %v572
        %1441 = vmatpush1.msra.mxu0 %v571
        %1442 = vmatprep.subr.mxu0 %v567
        %1443 = vmatpush1.msra.mxu0 %v566
        %1444 = vmatprep.subr.mxu0 %v562
        %1445 = vmatpush1.msra.mxu0 %v561
        %1446 = vmatprep.subr.mxu0 %v557
        %1447 = vmatpush1.msra.mxu0 %v556
        %1448 = vmatprep.subr.mxu0 %v552
        %1449 = vmatpush1.msra.mxu0 %v551
        %1450 = vmatprep.subr.mxu0 %v547
        %1451 = vmatpush1.msra.mxu0 %v546
        %1452 = vmatprep.subr.mxu0 %v542
        %1453 = vmatpush1.msra.mxu0 %v541
        %1454 = vmatprep.subr.mxu0 %v537
        %1455 = vmatpush1.msra.mxu0 %v536
        %1456 = vmatprep.subr.mxu0 %v532
        %1457 = vmatpush1.msra.mxu0 %v531
        %1458 = vmatprep.subr.mxu0 %v527
        %1459 = vmatpush1.msra.mxu0 %v526
        %1460 = vmatprep.subr.mxu0 %v522
        %1461 = vmatpush1.msra.mxu0 %v521
        %1462 = vmatprep.subr.mxu0 %v517
        %1463 = vmatpush1.msra.mxu0 %v516
        %1464 = vmatprep.subr.mxu0 %v512
        %1465 = vmatpush1.msra.mxu0 %v511
        %1466 = vmatprep.subr.mxu0 %v507
        %1467 = vmatpush1.msra.mxu0 %v506
        %1468 = vmatprep.subr.mxu0 %v502
        %1469 = vmatpush1.msra.mxu0 %v501
        %1470 = vmatprep.subr.mxu0 %v657
        %1471 = vmatpush2.msra.mxu0 %v656
        %1472 = vmatprep.subr.mxu0 %v652
        %1473 = vmatpush2.msra.mxu0 %v651
        %1474 = vmatprep.subr.mxu0 %v647
        %1475 = vmatpush2.msra.mxu0 %v646
        %1476 = vmatprep.subr.mxu0 %v642
        %1477 = vmatpush2.msra.mxu0 %v641
        %1478 = vmatprep.subr.mxu0 %v637
        %1479 = vmatpush2.msra.mxu0 %v636
        %1480 = vmatprep.subr.mxu0 %v632
        %1481 = vmatpush2.msra.mxu0 %v631
        %1482 = vmatprep.subr.mxu0 %v627
        %1483 = vmatpush2.msra.mxu0 %v626
        %1484 = vmatprep.subr.mxu0 %v622
        %1485 = vmatpush2.msra.mxu0 %v621
        %1486 = vmatprep.subr.mxu0 %v617
        %1487 = vmatpush2.msra.mxu0 %v616
        %1488 = vmatprep.subr.mxu0 %v612
        %1489 = vmatpush2.msra.mxu0 %v611
        %1490 = vmatprep.subr.mxu0 %v607
        %1491 = vmatpush2.msra.mxu0 %v606
        %1492 = vmatprep.subr.mxu0 %v602
        %1493 = vmatpush2.msra.mxu0 %v601
        %1494 = vmatprep.subr.mxu0 %v597
        %1495 = vmatpush2.msra.mxu0 %v596
        %1496 = vmatprep.subr.mxu0 %v592
        %1497 = vmatpush2.msra.mxu0 %v591
        %1498 = vmatprep.subr.mxu0 %v587
        %1499 = vmatpush2.msra.mxu0 %v586
        %1500 = vmatprep.subr.mxu0 %v582
        %1501 = vmatpush2.msra.mxu0 %v581
        %1502 = vmatprep.mubr.f32.mxu0 %v1257
        %1503 = vmatmul.mubr.f32.gmra.mxu0 %v1249
        %v1504 = vpop.f32.mrf.mxu0
        %v1505 = vadd.f32 %v1434, %v1504
        %v1506 = vpop.f32.mrf.mxu0
        %v1507 = vadd.f32 %v1436, %v1506
        %1508 = vdwg.mxu0
        %1509 = vmatprep.subr.mxu0 %v737
        %1510 = vmatpush1.msra.mxu0 %v736
        %1511 = vmatprep.subr.mxu0 %v732
        %1512 = vmatpush1.msra.mxu0 %v731
        %1513 = vmatprep.subr.mxu0 %v727
        %1514 = vmatpush1.msra.mxu0 %v726
        %1515 = vmatprep.subr.mxu0 %v722
        %1516 = vmatpush1.msra.mxu0 %v721
        %1517 = vmatprep.subr.mxu0 %v717
        %1518 = vmatpush1.msra.mxu0 %v716
        %1519 = vmatprep.subr.mxu0 %v712
        %1520 = vmatpush1.msra.mxu0 %v711
        %1521 = vmatprep.subr.mxu0 %v707
        %1522 = vmatpush1.msra.mxu0 %v706
        %1523 = vmatprep.subr.mxu0 %v702
        %1524 = vmatpush1.msra.mxu0 %v701
        %1525 = vmatprep.subr.mxu0 %v697
        %1526 = vmatpush1.msra.mxu0 %v696
        %1527 = vmatprep.subr.mxu0 %v692
        %1528 = vmatpush1.msra.mxu0 %v691
        %1529 = vmatprep.subr.mxu0 %v687
        %1530 = vmatpush1.msra.mxu0 %v686
        %1531 = vmatprep.subr.mxu0 %v682
        %1532 = vmatpush1.msra.mxu0 %v681
        %1533 = vmatprep.subr.mxu0 %v677
        %1534 = vmatpush1.msra.mxu0 %v676
        %1535 = vmatprep.subr.mxu0 %v672
        %1536 = vmatpush1.msra.mxu0 %v671
        %1537 = vmatprep.subr.mxu0 %v667
        %1538 = vmatpush1.msra.mxu0 %v666
        %1539 = vmatprep.subr.mxu0 %v662
        %1540 = vmatpush1.msra.mxu0 %v661
        %1541 = vmatprep.subr.mxu0 %v817
        %1542 = vmatpush2.msra.mxu0 %v816
        %1543 = vmatprep.subr.mxu0 %v812
        %1544 = vmatpush2.msra.mxu0 %v811
        %1545 = vmatprep.subr.mxu0 %v807
        %1546 = vmatpush2.msra.mxu0 %v806
        %1547 = vmatprep.subr.mxu0 %v802
        %1548 = vmatpush2.msra.mxu0 %v801
        %1549 = vmatprep.subr.mxu0 %v797
        %1550 = vmatpush2.msra.mxu0 %v796
        %1551 = vmatprep.subr.mxu0 %v792
        %1552 = vmatpush2.msra.mxu0 %v791
        %1553 = vmatprep.subr.mxu0 %v787
        %1554 = vmatpush2.msra.mxu0 %v786
        %1555 = vmatprep.subr.mxu0 %v782
        %1556 = vmatpush2.msra.mxu0 %v781
        %1557 = vmatprep.subr.mxu0 %v777
        %1558 = vmatpush2.msra.mxu0 %v776
        %1559 = vmatprep.subr.mxu0 %v772
        %1560 = vmatpush2.msra.mxu0 %v771
        %1561 = vmatprep.subr.mxu0 %v767
        %1562 = vmatpush2.msra.mxu0 %v766
        %1563 = vmatprep.subr.mxu0 %v762
        %1564 = vmatpush2.msra.mxu0 %v761
        %1565 = vmatprep.subr.mxu0 %v757
        %1566 = vmatpush2.msra.mxu0 %v756
        %1567 = vmatprep.subr.mxu0 %v752
        %1568 = vmatpush2.msra.mxu0 %v751
        %1569 = vmatprep.subr.mxu0 %v747
        %1570 = vmatpush2.msra.mxu0 %v746
        %1571 = vmatprep.subr.mxu0 %v742
        %1572 = vmatpush2.msra.mxu0 %v741
        %1573 = vmatprep.mubr.f32.mxu0 %v1258
        %1574 = vmatmul.mubr.f32.gmra.mxu0 %v1256
        %v1575 = vpop.f32.mrf.mxu0
        %v1576 = vadd.f32 %v1505, %v1575
        %v1577 = vpop.f32.mrf.mxu0
        %v1578 = vadd.f32 %v1507, %v1577
        %1579 = vdwg.mxu0
        %1580 = vmatprep.subr.mxu0 %v897
        %1581 = vmatpush1.msra.mxu0 %v896
        %1582 = vmatprep.subr.mxu0 %v892
        %1583 = vmatpush1.msra.mxu0 %v891
        %1584 = vmatprep.subr.mxu0 %v887
        %1585 = vmatpush1.msra.mxu0 %v886
        %1586 = vmatprep.subr.mxu0 %v882
        %1587 = vmatpush1.msra.mxu0 %v881
        %1588 = vmatprep.subr.mxu0 %v877
        %1589 = vmatpush1.msra.mxu0 %v876
        %1590 = vmatprep.subr.mxu0 %v872
        %1591 = vmatpush1.msra.mxu0 %v871
        %1592 = vmatprep.subr.mxu0 %v867
        %1593 = vmatpush1.msra.mxu0 %v866
        %1594 = vmatprep.subr.mxu0 %v862
        %1595 = vmatpush1.msra.mxu0 %v861
        %1596 = vmatprep.subr.mxu0 %v857
        %1597 = vmatpush1.msra.mxu0 %v856
        %1598 = vmatprep.subr.mxu0 %v852
        %1599 = vmatpush1.msra.mxu0 %v851
        %1600 = vmatprep.subr.mxu0 %v847
        %1601 = vmatpush1.msra.mxu0 %v846
        %1602 = vmatprep.subr.mxu0 %v842
        %1603 = vmatpush1.msra.mxu0 %v841
        %1604 = vmatprep.subr.mxu0 %v837
        %1605 = vmatpush1.msra.mxu0 %v836
        %1606 = vmatprep.subr.mxu0 %v832
        %1607 = vmatpush1.msra.mxu0 %v831
        %1608 = vmatprep.subr.mxu0 %v827
        %1609 = vmatpush1.msra.mxu0 %v826
        %1610 = vmatprep.subr.mxu0 %v822
        %1611 = vmatpush1.msra.mxu0 %v821
        %1612 = vmatprep.subr.mxu0 %v977
        %1613 = vmatpush2.msra.mxu0 %v976
        %1614 = vmatprep.subr.mxu0 %v972
        %1615 = vmatpush2.msra.mxu0 %v971
        %1616 = vmatprep.subr.mxu0 %v967
        %1617 = vmatpush2.msra.mxu0 %v966
        %1618 = vmatprep.subr.mxu0 %v962
        %1619 = vmatpush2.msra.mxu0 %v961
        %1620 = vmatprep.subr.mxu0 %v957
        %1621 = vmatpush2.msra.mxu0 %v956
        %1622 = vmatprep.subr.mxu0 %v952
        %1623 = vmatpush2.msra.mxu0 %v951
        %1624 = vmatprep.subr.mxu0 %v947
        %1625 = vmatpush2.msra.mxu0 %v946
        %1626 = vmatprep.subr.mxu0 %v942
        %1627 = vmatpush2.msra.mxu0 %v941
        %1628 = vmatprep.subr.mxu0 %v937
        %1629 = vmatpush2.msra.mxu0 %v936
        %1630 = vmatprep.subr.mxu0 %v932
        %1631 = vmatpush2.msra.mxu0 %v931
        %1632 = vmatprep.subr.mxu0 %v927
        %1633 = vmatpush2.msra.mxu0 %v926
        %1634 = vmatprep.subr.mxu0 %v922
        %1635 = vmatpush2.msra.mxu0 %v921
        %1636 = vmatprep.subr.mxu0 %v917
        %1637 = vmatpush2.msra.mxu0 %v916
        %1638 = vmatprep.subr.mxu0 %v912
        %1639 = vmatpush2.msra.mxu0 %v911
        %1640 = vmatprep.subr.mxu0 %v907
        %1641 = vmatpush2.msra.mxu0 %v906
        %1642 = vmatprep.subr.mxu0 %v902
        %1643 = vmatpush2.msra.mxu0 %v901
        %1644 = vmatprep.mubr.f32.mxu0 %v1274
        %1645 = vmatmul.mubr.f32.gmra.mxu0 %v1266
        %v1646 = vpop.f32.mrf.mxu0
        %v1647 = vadd.f32 %v1576, %v1646
        %v1648 = vpop.f32.mrf.mxu0
        %v1649 = vadd.f32 %v1578, %v1648
        %1650 = vdwg.mxu0
        %1651 = vmatprep.subr.mxu0 %v1057
        %1652 = vmatpush1.msra.mxu0 %v1056
        %1653 = vmatprep.subr.mxu0 %v1052
        %1654 = vmatpush1.msra.mxu0 %v1051
        %1655 = vmatprep.subr.mxu0 %v1047
        %1656 = vmatpush1.msra.mxu0 %v1046
        %1657 = vmatprep.subr.mxu0 %v1042
        %1658 = vmatpush1.msra.mxu0 %v1041
        %1659 = vmatprep.subr.mxu0 %v1037
        %1660 = vmatpush1.msra.mxu0 %v1036
        %1661 = vmatprep.subr.mxu0 %v1032
        %1662 = vmatpush1.msra.mxu0 %v1031
        %1663 = vmatprep.subr.mxu0 %v1027
        %1664 = vmatpush1.msra.mxu0 %v1026
        %1665 = vmatprep.subr.mxu0 %v1022
        %1666 = vmatpush1.msra.mxu0 %v1021
        %1667 = vmatprep.subr.mxu0 %v1017
        %1668 = vmatpush1.msra.mxu0 %v1016
        %1669 = vmatprep.subr.mxu0 %v1012
        %1670 = vmatpush1.msra.mxu0 %v1011
        %1671 = vmatprep.subr.mxu0 %v1007
        %1672 = vmatpush1.msra.mxu0 %v1006
        %1673 = vmatprep.subr.mxu0 %v1002
        %1674 = vmatpush1.msra.mxu0 %v1001
        %1675 = vmatprep.subr.mxu0 %v997
        %1676 = vmatpush1.msra.mxu0 %v996
        %1677 = vmatprep.subr.mxu0 %v992
        %1678 = vmatpush1.msra.mxu0 %v991
        %1679 = vmatprep.subr.mxu0 %v987
        %1680 = vmatpush1.msra.mxu0 %v986
        %1681 = vmatprep.subr.mxu0 %v982
        %1682 = vmatpush1.msra.mxu0 %v981
        %1683 = vmatprep.subr.mxu0 %v1137
        %1684 = vmatpush2.msra.mxu0 %v1136
        %1685 = vmatprep.subr.mxu0 %v1132
        %1686 = vmatpush2.msra.mxu0 %v1131
        %1687 = vmatprep.subr.mxu0 %v1127
        %1688 = vmatpush2.msra.mxu0 %v1126
        %1689 = vmatprep.subr.mxu0 %v1122
        %1690 = vmatpush2.msra.mxu0 %v1121
        %1691 = vmatprep.subr.mxu0 %v1117
        %1692 = vmatpush2.msra.mxu0 %v1116
        %1693 = vmatprep.subr.mxu0 %v1112
        %1694 = vmatpush2.msra.mxu0 %v1111
        %1695 = vmatprep.subr.mxu0 %v1107
        %1696 = vmatpush2.msra.mxu0 %v1106
        %1697 = vmatprep.subr.mxu0 %v1102
        %1698 = vmatpush2.msra.mxu0 %v1101
        %1699 = vmatprep.subr.mxu0 %v1097
        %1700 = vmatpush2.msra.mxu0 %v1096
        %1701 = vmatprep.subr.mxu0 %v1092
        %1702 = vmatpush2.msra.mxu0 %v1091
        %1703 = vmatprep.subr.mxu0 %v1087
        %1704 = vmatpush2.msra.mxu0 %v1086
        %1705 = vmatprep.subr.mxu0 %v1082
        %1706 = vmatpush2.msra.mxu0 %v1081
        %1707 = vmatprep.subr.mxu0 %v1077
        %1708 = vmatpush2.msra.mxu0 %v1076
        %1709 = vmatprep.subr.mxu0 %v1072
        %1710 = vmatpush2.msra.mxu0 %v1071
        %1711 = vmatprep.subr.mxu0 %v1067
        %1712 = vmatpush2.msra.mxu0 %v1066
        %1713 = vmatprep.subr.mxu0 %v1062
        %1714 = vmatpush2.msra.mxu0 %v1061
        %1715 = vmatprep.mubr.f32.mxu0 %v1275
        %1716 = vmatmul.mubr.f32.gmra.mxu0 %v1273
        %v1717 = vpop.f32.mrf.mxu0
        %v1718 = vadd.f32 %v1647, %v1717
        %v1719 = vpop.f32.mrf.mxu0
        %v1720 = vadd.f32 %v1649, %v1719
        %1721 = vdwg.mxu0
        %1722 = vmatprep.subr.mxu0 %v1217
        %1723 = vmatpush1.msra.mxu0 %v1216
        %1724 = vmatprep.subr.mxu0 %v1212
        %1725 = vmatpush1.msra.mxu0 %v1211
        %1726 = vmatprep.subr.mxu0 %v1207
        %1727 = vmatpush1.msra.mxu0 %v1206
        %1728 = vmatprep.subr.mxu0 %v1202
        %1729 = vmatpush1.msra.mxu0 %v1201
        %1730 = vmatprep.subr.mxu0 %v1197
        %1731 = vmatpush1.msra.mxu0 %v1196
        %1732 = vmatprep.subr.mxu0 %v1192
        %1733 = vmatpush1.msra.mxu0 %v1191
        %1734 = vmatprep.subr.mxu0 %v1187
        %1735 = vmatpush1.msra.mxu0 %v1186
        %1736 = vmatprep.subr.mxu0 %v1182
        %1737 = vmatpush1.msra.mxu0 %v1181
        %1738 = vmatprep.subr.mxu0 %v1177
        %1739 = vmatpush1.msra.mxu0 %v1176
        %1740 = vmatprep.subr.mxu0 %v1172
        %1741 = vmatpush1.msra.mxu0 %v1171
        %1742 = vmatprep.subr.mxu0 %v1167
        %1743 = vmatpush1.msra.mxu0 %v1166
        %1744 = vmatprep.subr.mxu0 %v1162
        %1745 = vmatpush1.msra.mxu0 %v1161
        %1746 = vmatprep.subr.mxu0 %v1157
        %1747 = vmatpush1.msra.mxu0 %v1156
        %1748 = vmatprep.subr.mxu0 %v1152
        %1749 = vmatpush1.msra.mxu0 %v1151
        %1750 = vmatprep.subr.mxu0 %v1147
        %1751 = vmatpush1.msra.mxu0 %v1146
        %1752 = vmatprep.subr.mxu0 %v1142
        %1753 = vmatpush1.msra.mxu0 %v1141
        %1754 = vmatprep.subr.mxu0 0.0
        %1755 = vmatpush2.msra.mxu0 0.0
        %1756 = vmatprep.subr.mxu0 0.0
        %1757 = vmatpush2.msra.mxu0 0.0
        %1758 = vmatprep.subr.mxu0 0.0
        %1759 = vmatpush2.msra.mxu0 0.0
        %1760 = vmatprep.subr.mxu0 0.0
        %1761 = vmatpush2.msra.mxu0 0.0
        %1762 = vmatprep.subr.mxu0 0.0
        %1763 = vmatpush2.msra.mxu0 0.0
        %1764 = vmatprep.subr.mxu0 0.0
        %1765 = vmatpush2.msra.mxu0 0.0
        %1766 = vmatprep.subr.mxu0 0.0
        %1767 = vmatpush2.msra.mxu0 0.0
        %1768 = vmatprep.subr.mxu0 0.0
        %1769 = vmatpush2.msra.mxu0 0.0
        %1770 = vmatprep.subr.mxu0 0.0
        %1771 = vmatpush2.msra.mxu0 0.0
        %1772 = vmatprep.subr.mxu0 0.0
        %1773 = vmatpush2.msra.mxu0 0.0
        %1774 = vmatprep.subr.mxu0 0.0
        %1775 = vmatpush2.msra.mxu0 0.0
        %1776 = vmatprep.subr.mxu0 0.0
        %1777 = vmatpush2.msra.mxu0 0.0
        %1778 = vmatprep.subr.mxu0 0.0
        %1779 = vmatpush2.msra.mxu0 0.0
        %1780 = vmatprep.subr.mxu0 0.0
        %1781 = vmatpush2.msra.mxu0 0.0
        %1782 = vmatprep.subr.mxu0 0.0
        %1783 = vmatpush2.msra.mxu0 0.0
        %1784 = vmatprep.subr.mxu0 0.0
        %1785 = vmatpush2.msra.mxu0 0.0
        %1786 = vmatprep.mubr.f32.mxu0 0.0
        %1787 = vmatmul.mubr.f32.gmra.mxu0 %v1282
        %v1788 = vpop.f32.mrf.mxu0
        %v1789 = vadd.f32 %v1718, %v1788
        %v1790 = vpop.f32.mrf.mxu0
        %v1791 = vadd.f32 %v1720, %v1790
        %1792 = vdwg.mxu0
        %1793 = vmatprep.subr.mxu0 %v259
        %1794 = vmatpush1.msra.mxu0 %v258
        %1795 = vmatprep.subr.mxu0 %v254
        %1796 = vmatpush1.msra.mxu0 %v253
        %1797 = vmatprep.subr.mxu0 %v249
        %1798 = vmatpush1.msra.mxu0 %v248
        %1799 = vmatprep.subr.mxu0 %v244
        %1800 = vmatpush1.msra.mxu0 %v243
        %1801 = vmatprep.subr.mxu0 %v239
        %1802 = vmatpush1.msra.mxu0 %v238
        %1803 = vmatprep.subr.mxu0 %v234
        %1804 = vmatpush1.msra.mxu0 %v233
        %1805 = vmatprep.subr.mxu0 %v229
        %1806 = vmatpush1.msra.mxu0 %v228
        %1807 = vmatprep.subr.mxu0 %v224
        %1808 = vmatpush1.msra.mxu0 %v223
        %1809 = vmatprep.subr.mxu0 %v219
        %1810 = vmatpush1.msra.mxu0 %v218
        %1811 = vmatprep.subr.mxu0 %v214
        %1812 = vmatpush1.msra.mxu0 %v213
        %1813 = vmatprep.subr.mxu0 %v209
        %1814 = vmatpush1.msra.mxu0 %v208
        %1815 = vmatprep.subr.mxu0 %v204
        %1816 = vmatpush1.msra.mxu0 %v203
        %1817 = vmatprep.subr.mxu0 %v199
        %1818 = vmatpush1.msra.mxu0 %v198
        %1819 = vmatprep.subr.mxu0 %v194
        %1820 = vmatpush1.msra.mxu0 %v193
        %1821 = vmatprep.subr.mxu0 %v189
        %1822 = vmatpush1.msra.mxu0 %v188
        %1823 = vmatprep.subr.mxu0 %v184
        %1824 = vmatpush1.msra.mxu0 %v183
        %1825 = vmatprep.subr.mxu0 %v339
        %1826 = vmatpush2.msra.mxu0 %v338
        %1827 = vmatprep.subr.mxu0 %v334
        %1828 = vmatpush2.msra.mxu0 %v333
        %1829 = vmatprep.subr.mxu0 %v329
        %1830 = vmatpush2.msra.mxu0 %v328
        %1831 = vmatprep.subr.mxu0 %v324
        %1832 = vmatpush2.msra.mxu0 %v323
        %1833 = vmatprep.subr.mxu0 %v319
        %1834 = vmatpush2.msra.mxu0 %v318
        %1835 = vmatprep.subr.mxu0 %v314
        %1836 = vmatpush2.msra.mxu0 %v313
        %1837 = vmatprep.subr.mxu0 %v309
        %1838 = vmatpush2.msra.mxu0 %v308
        %1839 = vmatprep.subr.mxu0 %v304
        %1840 = vmatpush2.msra.mxu0 %v303
        %1841 = vmatprep.subr.mxu0 %v299
        %1842 = vmatpush2.msra.mxu0 %v298
        %1843 = vmatprep.subr.mxu0 %v294
        %1844 = vmatpush2.msra.mxu0 %v293
        %1845 = vmatprep.subr.mxu0 %v289
        %1846 = vmatpush2.msra.mxu0 %v288
        %1847 = vmatprep.subr.mxu0 %v284
        %1848 = vmatpush2.msra.mxu0 %v283
        %1849 = vmatprep.subr.mxu0 %v279
        %1850 = vmatpush2.msra.mxu0 %v278
        %1851 = vmatprep.subr.mxu0 %v274
        %1852 = vmatpush2.msra.mxu0 %v273
        %1853 = vmatprep.subr.mxu0 %v269
        %1854 = vmatpush2.msra.mxu0 %v268
        %1855 = vmatprep.subr.mxu0 %v264
        %1856 = vmatpush2.msra.mxu0 %v263
        %1857 = vmatprep.mubr.f32.mxu0 %v1240
        %1858 = vmatmul.mubr.f32.gmra.mxu0 %v1232
        %v1859 = vpop.f32.mrf.mxu0
        %v1860 = vadd.f32 0.0, %v1859
        %v1861 = vpop.f32.mrf.mxu0
        %v1862 = vadd.f32 0.0, %v1861
        %1863 = vdwg.mxu0
        %1864 = vmatprep.subr.mxu0 %v419
        %1865 = vmatpush1.msra.mxu0 %v418
        %1866 = vmatprep.subr.mxu0 %v414
        %1867 = vmatpush1.msra.mxu0 %v413
        %1868 = vmatprep.subr.mxu0 %v409
        %1869 = vmatpush1.msra.mxu0 %v408
        %1870 = vmatprep.subr.mxu0 %v404
        %1871 = vmatpush1.msra.mxu0 %v403
        %1872 = vmatprep.subr.mxu0 %v399
        %1873 = vmatpush1.msra.mxu0 %v398
        %1874 = vmatprep.subr.mxu0 %v394
        %1875 = vmatpush1.msra.mxu0 %v393
        %1876 = vmatprep.subr.mxu0 %v389
        %1877 = vmatpush1.msra.mxu0 %v388
        %1878 = vmatprep.subr.mxu0 %v384
        %1879 = vmatpush1.msra.mxu0 %v383
        %1880 = vmatprep.subr.mxu0 %v379
        %1881 = vmatpush1.msra.mxu0 %v378
        %1882 = vmatprep.subr.mxu0 %v374
        %1883 = vmatpush1.msra.mxu0 %v373
        %1884 = vmatprep.subr.mxu0 %v369
        %1885 = vmatpush1.msra.mxu0 %v368
        %1886 = vmatprep.subr.mxu0 %v364
        %1887 = vmatpush1.msra.mxu0 %v363
        %1888 = vmatprep.subr.mxu0 %v359
        %1889 = vmatpush1.msra.mxu0 %v358
        %1890 = vmatprep.subr.mxu0 %v354
        %1891 = vmatpush1.msra.mxu0 %v353
        %1892 = vmatprep.subr.mxu0 %v349
        %1893 = vmatpush1.msra.mxu0 %v348
        %1894 = vmatprep.subr.mxu0 %v344
        %1895 = vmatpush1.msra.mxu0 %v343
        %1896 = vmatprep.subr.mxu0 %v499
        %1897 = vmatpush2.msra.mxu0 %v498
        %1898 = vmatprep.subr.mxu0 %v494
        %1899 = vmatpush2.msra.mxu0 %v493
        %1900 = vmatprep.subr.mxu0 %v489
        %1901 = vmatpush2.msra.mxu0 %v488
        %1902 = vmatprep.subr.mxu0 %v484
        %1903 = vmatpush2.msra.mxu0 %v483
        %1904 = vmatprep.subr.mxu0 %v479
        %1905 = vmatpush2.msra.mxu0 %v478
        %1906 = vmatprep.subr.mxu0 %v474
        %1907 = vmatpush2.msra.mxu0 %v473
        %1908 = vmatprep.subr.mxu0 %v469
        %1909 = vmatpush2.msra.mxu0 %v468
        %1910 = vmatprep.subr.mxu0 %v464
        %1911 = vmatpush2.msra.mxu0 %v463
        %1912 = vmatprep.subr.mxu0 %v459
        %1913 = vmatpush2.msra.mxu0 %v458
        %1914 = vmatprep.subr.mxu0 %v454
        %1915 = vmatpush2.msra.mxu0 %v453
        %1916 = vmatprep.subr.mxu0 %v449
        %1917 = vmatpush2.msra.mxu0 %v448
        %1918 = vmatprep.subr.mxu0 %v444
        %1919 = vmatpush2.msra.mxu0 %v443
        %1920 = vmatprep.subr.mxu0 %v439
        %1921 = vmatpush2.msra.mxu0 %v438
        %1922 = vmatprep.subr.mxu0 %v434
        %1923 = vmatpush2.msra.mxu0 %v433
        %1924 = vmatprep.subr.mxu0 %v429
        %1925 = vmatpush2.msra.mxu0 %v428
        %1926 = vmatprep.subr.mxu0 %v424
        %1927 = vmatpush2.msra.mxu0 %v423
        %1928 = vmatprep.mubr.f32.mxu0 %v1241
        %1929 = vmatmul.mubr.f32.gmra.mxu0 %v1239
        %v1930 = vpop.f32.mrf.mxu0
        %v1931 = vadd.f32 %v1860, %v1930
        %v1932 = vpop.f32.mrf.mxu0
        %v1933 = vadd.f32 %v1862, %v1932
        %1934 = vdwg.mxu0
        %1935 = vmatprep.subr.mxu0 %v579
        %1936 = vmatpush1.msra.mxu0 %v578
        %1937 = vmatprep.subr.mxu0 %v574
        %1938 = vmatpush1.msra.mxu0 %v573
        %1939 = vmatprep.subr.mxu0 %v569
        %1940 = vmatpush1.msra.mxu0 %v568
        %1941 = vmatprep.subr.mxu0 %v564
        %1942 = vmatpush1.msra.mxu0 %v563
        %1943 = vmatprep.subr.mxu0 %v559
        %1944 = vmatpush1.msra.mxu0 %v558
        %1945 = vmatprep.subr.mxu0 %v554
        %1946 = vmatpush1.msra.mxu0 %v553
        %1947 = vmatprep.subr.mxu0 %v549
        %1948 = vmatpush1.msra.mxu0 %v548
        %1949 = vmatprep.subr.mxu0 %v544
        %1950 = vmatpush1.msra.mxu0 %v543
        %1951 = vmatprep.subr.mxu0 %v539
        %1952 = vmatpush1.msra.mxu0 %v538
        %1953 = vmatprep.subr.mxu0 %v534
        %1954 = vmatpush1.msra.mxu0 %v533
        %1955 = vmatprep.subr.mxu0 %v529
        %1956 = vmatpush1.msra.mxu0 %v528
        %1957 = vmatprep.subr.mxu0 %v524
        %1958 = vmatpush1.msra.mxu0 %v523
        %1959 = vmatprep.subr.mxu0 %v519
        %1960 = vmatpush1.msra.mxu0 %v518
        %1961 = vmatprep.subr.mxu0 %v514
        %1962 = vmatpush1.msra.mxu0 %v513
        %1963 = vmatprep.subr.mxu0 %v509
        %1964 = vmatpush1.msra.mxu0 %v508
        %1965 = vmatprep.subr.mxu0 %v504
        %1966 = vmatpush1.msra.mxu0 %v503
        %1967 = vmatprep.subr.mxu0 %v659
        %1968 = vmatpush2.msra.mxu0 %v658
        %1969 = vmatprep.subr.mxu0 %v654
        %1970 = vmatpush2.msra.mxu0 %v653
        %1971 = vmatprep.subr.mxu0 %v649
        %1972 = vmatpush2.msra.mxu0 %v648
        %1973 = vmatprep.subr.mxu0 %v644
        %1974 = vmatpush2.msra.mxu0 %v643
        %1975 = vmatprep.subr.mxu0 %v639
        %1976 = vmatpush2.msra.mxu0 %v638
        %1977 = vmatprep.subr.mxu0 %v634
        %1978 = vmatpush2.msra.mxu0 %v633
        %1979 = vmatprep.subr.mxu0 %v629
        %1980 = vmatpush2.msra.mxu0 %v628
        %1981 = vmatprep.subr.mxu0 %v624
        %1982 = vmatpush2.msra.mxu0 %v623
        %1983 = vmatprep.subr.mxu0 %v619
        %1984 = vmatpush2.msra.mxu0 %v618
        %1985 = vmatprep.subr.mxu0 %v614
        %1986 = vmatpush2.msra.mxu0 %v613
        %1987 = vmatprep.subr.mxu0 %v609
        %1988 = vmatpush2.msra.mxu0 %v608
        %1989 = vmatprep.subr.mxu0 %v604
        %1990 = vmatpush2.msra.mxu0 %v603
        %1991 = vmatprep.subr.mxu0 %v599
        %1992 = vmatpush2.msra.mxu0 %v598
        %1993 = vmatprep.subr.mxu0 %v594
        %1994 = vmatpush2.msra.mxu0 %v593
        %1995 = vmatprep.subr.mxu0 %v589
        %1996 = vmatpush2.msra.mxu0 %v588
        %1997 = vmatprep.subr.mxu0 %v584
        %1998 = vmatpush2.msra.mxu0 %v583
        %1999 = vmatprep.mubr.f32.mxu0 %v1257
        %2000 = vmatmul.mubr.f32.gmra.mxu0 %v1249
        %v2001 = vpop.f32.mrf.mxu0
        %v2002 = vadd.f32 %v1931, %v2001
        %v2003 = vpop.f32.mrf.mxu0
        %v2004 = vadd.f32 %v1933, %v2003
        %2005 = vdwg.mxu0
        %2006 = vmatprep.subr.mxu0 %v739
        %2007 = vmatpush1.msra.mxu0 %v738
        %2008 = vmatprep.subr.mxu0 %v734
        %2009 = vmatpush1.msra.mxu0 %v733
        %2010 = vmatprep.subr.mxu0 %v729
        %2011 = vmatpush1.msra.mxu0 %v728
        %2012 = vmatprep.subr.mxu0 %v724
        %2013 = vmatpush1.msra.mxu0 %v723
        %2014 = vmatprep.subr.mxu0 %v719
        %2015 = vmatpush1.msra.mxu0 %v718
        %2016 = vmatprep.subr.mxu0 %v714
        %2017 = vmatpush1.msra.mxu0 %v713
        %2018 = vmatprep.subr.mxu0 %v709
        %2019 = vmatpush1.msra.mxu0 %v708
        %2020 = vmatprep.subr.mxu0 %v704
        %2021 = vmatpush1.msra.mxu0 %v703
        %2022 = vmatprep.subr.mxu0 %v699
        %2023 = vmatpush1.msra.mxu0 %v698
        %2024 = vmatprep.subr.mxu0 %v694
        %2025 = vmatpush1.msra.mxu0 %v693
        %2026 = vmatprep.subr.mxu0 %v689
        %2027 = vmatpush1.msra.mxu0 %v688
        %2028 = vmatprep.subr.mxu0 %v684
        %2029 = vmatpush1.msra.mxu0 %v683
        %2030 = vmatprep.subr.mxu0 %v679
        %2031 = vmatpush1.msra.mxu0 %v678
        %2032 = vmatprep.subr.mxu0 %v674
        %2033 = vmatpush1.msra.mxu0 %v673
        %2034 = vmatprep.subr.mxu0 %v669
        %2035 = vmatpush1.msra.mxu0 %v668
        %2036 = vmatprep.subr.mxu0 %v664
        %2037 = vmatpush1.msra.mxu0 %v663
        %2038 = vmatprep.subr.mxu0 %v819
        %2039 = vmatpush2.msra.mxu0 %v818
        %2040 = vmatprep.subr.mxu0 %v814
        %2041 = vmatpush2.msra.mxu0 %v813
        %2042 = vmatprep.subr.mxu0 %v809
        %2043 = vmatpush2.msra.mxu0 %v808
        %2044 = vmatprep.subr.mxu0 %v804
        %2045 = vmatpush2.msra.mxu0 %v803
        %2046 = vmatprep.subr.mxu0 %v799
        %2047 = vmatpush2.msra.mxu0 %v798
        %2048 = vmatprep.subr.mxu0 %v794
        %2049 = vmatpush2.msra.mxu0 %v793
        %2050 = vmatprep.subr.mxu0 %v789
        %2051 = vmatpush2.msra.mxu0 %v788
        %2052 = vmatprep.subr.mxu0 %v784
        %2053 = vmatpush2.msra.mxu0 %v783
        %2054 = vmatprep.subr.mxu0 %v779
        %2055 = vmatpush2.msra.mxu0 %v778
        %2056 = vmatprep.subr.mxu0 %v774
        %2057 = vmatpush2.msra.mxu0 %v773
        %2058 = vmatprep.subr.mxu0 %v769
        %2059 = vmatpush2.msra.mxu0 %v768
        %2060 = vmatprep.subr.mxu0 %v764
        %2061 = vmatpush2.msra.mxu0 %v763
        %2062 = vmatprep.subr.mxu0 %v759
        %2063 = vmatpush2.msra.mxu0 %v758
        %2064 = vmatprep.subr.mxu0 %v754
        %2065 = vmatpush2.msra.mxu0 %v753
        %2066 = vmatprep.subr.mxu0 %v749
        %2067 = vmatpush2.msra.mxu0 %v748
        %2068 = vmatprep.subr.mxu0 %v744
        %2069 = vmatpush2.msra.mxu0 %v743
        %2070 = vmatprep.mubr.f32.mxu0 %v1258
        %2071 = vmatmul.mubr.f32.gmra.mxu0 %v1256
        %v2072 = vpop.f32.mrf.mxu0
        %v2073 = vadd.f32 %v2002, %v2072
        %v2074 = vpop.f32.mrf.mxu0
        %v2075 = vadd.f32 %v2004, %v2074
        %2076 = vdwg.mxu0
        %2077 = vmatprep.subr.mxu0 %v899
        %2078 = vmatpush1.msra.mxu0 %v898
        %2079 = vmatprep.subr.mxu0 %v894
        %2080 = vmatpush1.msra.mxu0 %v893
        %2081 = vmatprep.subr.mxu0 %v889
        %2082 = vmatpush1.msra.mxu0 %v888
        %2083 = vmatprep.subr.mxu0 %v884
        %2084 = vmatpush1.msra.mxu0 %v883
        %2085 = vmatprep.subr.mxu0 %v879
        %2086 = vmatpush1.msra.mxu0 %v878
        %2087 = vmatprep.subr.mxu0 %v874
        %2088 = vmatpush1.msra.mxu0 %v873
        %2089 = vmatprep.subr.mxu0 %v869
        %2090 = vmatpush1.msra.mxu0 %v868
        %2091 = vmatprep.subr.mxu0 %v864
        %2092 = vmatpush1.msra.mxu0 %v863
        %2093 = vmatprep.subr.mxu0 %v859
        %2094 = vmatpush1.msra.mxu0 %v858
        %2095 = vmatprep.subr.mxu0 %v854
        %2096 = vmatpush1.msra.mxu0 %v853
        %2097 = vmatprep.subr.mxu0 %v849
        %2098 = vmatpush1.msra.mxu0 %v848
        %2099 = vmatprep.subr.mxu0 %v844
        %2100 = vmatpush1.msra.mxu0 %v843
        %2101 = vmatprep.subr.mxu0 %v839
        %2102 = vmatpush1.msra.mxu0 %v838
        %2103 = vmatprep.subr.mxu0 %v834
        %2104 = vmatpush1.msra.mxu0 %v833
        %2105 = vmatprep.subr.mxu0 %v829
        %2106 = vmatpush1.msra.mxu0 %v828
        %2107 = vmatprep.subr.mxu0 %v824
        %2108 = vmatpush1.msra.mxu0 %v823
        %2109 = vmatprep.subr.mxu0 %v979
        %2110 = vmatpush2.msra.mxu0 %v978
        %2111 = vmatprep.subr.mxu0 %v974
        %2112 = vmatpush2.msra.mxu0 %v973
        %2113 = vmatprep.subr.mxu0 %v969
        %2114 = vmatpush2.msra.mxu0 %v968
        %2115 = vmatprep.subr.mxu0 %v964
        %2116 = vmatpush2.msra.mxu0 %v963
        %2117 = vmatprep.subr.mxu0 %v959
        %2118 = vmatpush2.msra.mxu0 %v958
        %2119 = vmatprep.subr.mxu0 %v954
        %2120 = vmatpush2.msra.mxu0 %v953
        %2121 = vmatprep.subr.mxu0 %v949
        %2122 = vmatpush2.msra.mxu0 %v948
        %2123 = vmatprep.subr.mxu0 %v944
        %2124 = vmatpush2.msra.mxu0 %v943
        %2125 = vmatprep.subr.mxu0 %v939
        %2126 = vmatpush2.msra.mxu0 %v938
        %2127 = vmatprep.subr.mxu0 %v934
        %2128 = vmatpush2.msra.mxu0 %v933
        %2129 = vmatprep.subr.mxu0 %v929
        %2130 = vmatpush2.msra.mxu0 %v928
        %2131 = vmatprep.subr.mxu0 %v924
        %2132 = vmatpush2.msra.mxu0 %v923
        %2133 = vmatprep.subr.mxu0 %v919
        %2134 = vmatpush2.msra.mxu0 %v918
        %2135 = vmatprep.subr.mxu0 %v914
        %2136 = vmatpush2.msra.mxu0 %v913
        %2137 = vmatprep.subr.mxu0 %v909
        %2138 = vmatpush2.msra.mxu0 %v908
        %2139 = vmatprep.subr.mxu0 %v904
        %2140 = vmatpush2.msra.mxu0 %v903
        %2141 = vmatprep.mubr.f32.mxu0 %v1274
        %2142 = vmatmul.mubr.f32.gmra.mxu0 %v1266
        %v2143 = vpop.f32.mrf.mxu0
        %v2144 = vadd.f32 %v2073, %v2143
        %v2145 = vpop.f32.mrf.mxu0
        %v2146 = vadd.f32 %v2075, %v2145
        %2147 = vdwg.mxu0
        %2148 = vmatprep.subr.mxu0 %v1059
        %2149 = vmatpush1.msra.mxu0 %v1058
        %2150 = vmatprep.subr.mxu0 %v1054
        %2151 = vmatpush1.msra.mxu0 %v1053
        %2152 = vmatprep.subr.mxu0 %v1049
        %2153 = vmatpush1.msra.mxu0 %v1048
        %2154 = vmatprep.subr.mxu0 %v1044
        %2155 = vmatpush1.msra.mxu0 %v1043
        %2156 = vmatprep.subr.mxu0 %v1039
        %2157 = vmatpush1.msra.mxu0 %v1038
        %2158 = vmatprep.subr.mxu0 %v1034
        %2159 = vmatpush1.msra.mxu0 %v1033
        %2160 = vmatprep.subr.mxu0 %v1029
        %2161 = vmatpush1.msra.mxu0 %v1028
        %2162 = vmatprep.subr.mxu0 %v1024
        %2163 = vmatpush1.msra.mxu0 %v1023
        %2164 = vmatprep.subr.mxu0 %v1019
        %2165 = vmatpush1.msra.mxu0 %v1018
        %2166 = vmatprep.subr.mxu0 %v1014
        %2167 = vmatpush1.msra.mxu0 %v1013
        %2168 = vmatprep.subr.mxu0 %v1009
        %2169 = vmatpush1.msra.mxu0 %v1008
        %2170 = vmatprep.subr.mxu0 %v1004
        %2171 = vmatpush1.msra.mxu0 %v1003
        %2172 = vmatprep.subr.mxu0 %v999
        %2173 = vmatpush1.msra.mxu0 %v998
        %2174 = vmatprep.subr.mxu0 %v994
        %2175 = vmatpush1.msra.mxu0 %v993
        %2176 = vmatprep.subr.mxu0 %v989
        %2177 = vmatpush1.msra.mxu0 %v988
        %2178 = vmatprep.subr.mxu0 %v984
        %2179 = vmatpush1.msra.mxu0 %v983
        %2180 = vmatprep.subr.mxu0 %v1139
        %2181 = vmatpush2.msra.mxu0 %v1138
        %2182 = vmatprep.subr.mxu0 %v1134
        %2183 = vmatpush2.msra.mxu0 %v1133
        %2184 = vmatprep.subr.mxu0 %v1129
        %2185 = vmatpush2.msra.mxu0 %v1128
        %2186 = vmatprep.subr.mxu0 %v1124
        %2187 = vmatpush2.msra.mxu0 %v1123
        %2188 = vmatprep.subr.mxu0 %v1119
        %2189 = vmatpush2.msra.mxu0 %v1118
        %2190 = vmatprep.subr.mxu0 %v1114
        %2191 = vmatpush2.msra.mxu0 %v1113
        %2192 = vmatprep.subr.mxu0 %v1109
        %2193 = vmatpush2.msra.mxu0 %v1108
        %2194 = vmatprep.subr.mxu0 %v1104
        %2195 = vmatpush2.msra.mxu0 %v1103
        %2196 = vmatprep.subr.mxu0 %v1099
        %2197 = vmatpush2.msra.mxu0 %v1098
        %2198 = vmatprep.subr.mxu0 %v1094
        %2199 = vmatpush2.msra.mxu0 %v1093
        %2200 = vmatprep.subr.mxu0 %v1089
        %2201 = vmatpush2.msra.mxu0 %v1088
        %2202 = vmatprep.subr.mxu0 %v1084
        %2203 = vmatpush2.msra.mxu0 %v1083
        %2204 = vmatprep.subr.mxu0 %v1079
        %2205 = vmatpush2.msra.mxu0 %v1078
        %2206 = vmatprep.subr.mxu0 %v1074
        %2207 = vmatpush2.msra.mxu0 %v1073
        %2208 = vmatprep.subr.mxu0 %v1069
        %2209 = vmatpush2.msra.mxu0 %v1068
        %2210 = vmatprep.subr.mxu0 %v1064
        %2211 = vmatpush2.msra.mxu0 %v1063
        %2212 = vmatprep.mubr.f32.mxu0 %v1275
        %2213 = vmatmul.mubr.f32.gmra.mxu0 %v1273
        %v2214 = vpop.f32.mrf.mxu0
        %v2215 = vadd.f32 %v2144, %v2214
        %v2216 = vpop.f32.mrf.mxu0
        %v2217 = vadd.f32 %v2146, %v2216
        %2218 = vdwg.mxu0
        %2219 = vmatprep.subr.mxu0 %v1219
        %2220 = vmatpush1.msra.mxu0 %v1218
        %2221 = vmatprep.subr.mxu0 %v1214
        %2222 = vmatpush1.msra.mxu0 %v1213
        %2223 = vmatprep.subr.mxu0 %v1209
        %2224 = vmatpush1.msra.mxu0 %v1208
        %2225 = vmatprep.subr.mxu0 %v1204
        %2226 = vmatpush1.msra.mxu0 %v1203
        %2227 = vmatprep.subr.mxu0 %v1199
        %2228 = vmatpush1.msra.mxu0 %v1198
        %2229 = vmatprep.subr.mxu0 %v1194
        %2230 = vmatpush1.msra.mxu0 %v1193
        %2231 = vmatprep.subr.mxu0 %v1189
        %2232 = vmatpush1.msra.mxu0 %v1188
        %2233 = vmatprep.subr.mxu0 %v1184
        %2234 = vmatpush1.msra.mxu0 %v1183
        %2235 = vmatprep.subr.mxu0 %v1179
        %2236 = vmatpush1.msra.mxu0 %v1178
        %2237 = vmatprep.subr.mxu0 %v1174
        %2238 = vmatpush1.msra.mxu0 %v1173
        %2239 = vmatprep.subr.mxu0 %v1169
        %2240 = vmatpush1.msra.mxu0 %v1168
        %2241 = vmatprep.subr.mxu0 %v1164
        %2242 = vmatpush1.msra.mxu0 %v1163
        %2243 = vmatprep.subr.mxu0 %v1159
        %2244 = vmatpush1.msra.mxu0 %v1158
        %2245 = vmatprep.subr.mxu0 %v1154
        %2246 = vmatpush1.msra.mxu0 %v1153
        %2247 = vmatprep.subr.mxu0 %v1149
        %2248 = vmatpush1.msra.mxu0 %v1148
        %2249 = vmatprep.subr.mxu0 %v1144
        %2250 = vmatpush1.msra.mxu0 %v1143
        %2251 = vmatprep.subr.mxu0 0.0
        %2252 = vmatpush2.msra.mxu0 0.0
        %2253 = vmatprep.subr.mxu0 0.0
        %2254 = vmatpush2.msra.mxu0 0.0
        %2255 = vmatprep.subr.mxu0 0.0
        %2256 = vmatpush2.msra.mxu0 0.0
        %2257 = vmatprep.subr.mxu0 0.0
        %2258 = vmatpush2.msra.mxu0 0.0
        %2259 = vmatprep.subr.mxu0 0.0
        %2260 = vmatpush2.msra.mxu0 0.0
        %2261 = vmatprep.subr.mxu0 0.0
        %2262 = vmatpush2.msra.mxu0 0.0
        %2263 = vmatprep.subr.mxu0 0.0
        %2264 = vmatpush2.msra.mxu0 0.0
        %2265 = vmatprep.subr.mxu0 0.0
        %2266 = vmatpush2.msra.mxu0 0.0
        %2267 = vmatprep.subr.mxu0 0.0
        %2268 = vmatpush2.msra.mxu0 0.0
        %2269 = vmatprep.subr.mxu0 0.0
        %2270 = vmatpush2.msra.mxu0 0.0
        %2271 = vmatprep.subr.mxu0 0.0
        %2272 = vmatpush2.msra.mxu0 0.0
        %2273 = vmatprep.subr.mxu0 0.0
        %2274 = vmatpush2.msra.mxu0 0.0
        %2275 = vmatprep.subr.mxu0 0.0
        %2276 = vmatpush2.msra.mxu0 0.0
        %2277 = vmatprep.subr.mxu0 0.0
        %2278 = vmatpush2.msra.mxu0 0.0
        %2279 = vmatprep.subr.mxu0 0.0
        %2280 = vmatpush2.msra.mxu0 0.0
        %2281 = vmatprep.subr.mxu0 0.0
        %2282 = vmatpush2.msra.mxu0 0.0
        %2283 = vmatprep.mubr.f32.mxu0 0.0
        %2284 = vmatmul.mubr.f32.gmra.mxu0 %v1282
        %v2285 = vpop.f32.mrf.mxu0
        %v2286 = vadd.f32 %v2215, %v2285
        %v2287 = vpop.f32.mrf.mxu0
        %v2288 = vadd.f32 %v2217, %v2287
        %2289 = vdwg.mxu0
        %2290 = vmatprep.subr.mxu0 0.0
        %2291 = vmatpush1.msra.mxu0 %v260
        %2292 = vmatprep.subr.mxu0 0.0
        %2293 = vmatpush1.msra.mxu0 %v255
        %2294 = vmatprep.subr.mxu0 0.0
        %2295 = vmatpush1.msra.mxu0 %v250
        %2296 = vmatprep.subr.mxu0 0.0
        %2297 = vmatpush1.msra.mxu0 %v245
        %2298 = vmatprep.subr.mxu0 0.0
        %2299 = vmatpush1.msra.mxu0 %v240
        %2300 = vmatprep.subr.mxu0 0.0
        %2301 = vmatpush1.msra.mxu0 %v235
        %2302 = vmatprep.subr.mxu0 0.0
        %2303 = vmatpush1.msra.mxu0 %v230
        %2304 = vmatprep.subr.mxu0 0.0
        %2305 = vmatpush1.msra.mxu0 %v225
        %2306 = vmatprep.subr.mxu0 0.0
        %2307 = vmatpush1.msra.mxu0 %v220
        %2308 = vmatprep.subr.mxu0 0.0
        %2309 = vmatpush1.msra.mxu0 %v215
        %2310 = vmatprep.subr.mxu0 0.0
        %2311 = vmatpush1.msra.mxu0 %v210
        %2312 = vmatprep.subr.mxu0 0.0
        %2313 = vmatpush1.msra.mxu0 %v205
        %2314 = vmatprep.subr.mxu0 0.0
        %2315 = vmatpush1.msra.mxu0 %v200
        %2316 = vmatprep.subr.mxu0 0.0
        %2317 = vmatpush1.msra.mxu0 %v195
        %2318 = vmatprep.subr.mxu0 0.0
        %2319 = vmatpush1.msra.mxu0 %v190
        %2320 = vmatprep.subr.mxu0 0.0
        %2321 = vmatpush1.msra.mxu0 %v185
        %2322 = vmatprep.subr.mxu0 0.0
        %2323 = vmatpush2.msra.mxu0 %v340
        %2324 = vmatprep.subr.mxu0 0.0
        %2325 = vmatpush2.msra.mxu0 %v335
        %2326 = vmatprep.subr.mxu0 0.0
        %2327 = vmatpush2.msra.mxu0 %v330
        %2328 = vmatprep.subr.mxu0 0.0
        %2329 = vmatpush2.msra.mxu0 %v325
        %2330 = vmatprep.subr.mxu0 0.0
        %2331 = vmatpush2.msra.mxu0 %v320
        %2332 = vmatprep.subr.mxu0 0.0
        %2333 = vmatpush2.msra.mxu0 %v315
        %2334 = vmatprep.subr.mxu0 0.0
        %2335 = vmatpush2.msra.mxu0 %v310
        %2336 = vmatprep.subr.mxu0 0.0
        %2337 = vmatpush2.msra.mxu0 %v305
        %2338 = vmatprep.subr.mxu0 0.0
        %2339 = vmatpush2.msra.mxu0 %v300
        %2340 = vmatprep.subr.mxu0 0.0
        %2341 = vmatpush2.msra.mxu0 %v295
        %2342 = vmatprep.subr.mxu0 0.0
        %2343 = vmatpush2.msra.mxu0 %v290
        %2344 = vmatprep.subr.mxu0 0.0
        %2345 = vmatpush2.msra.mxu0 %v285
        %2346 = vmatprep.subr.mxu0 0.0
        %2347 = vmatpush2.msra.mxu0 %v280
        %2348 = vmatprep.subr.mxu0 0.0
        %2349 = vmatpush2.msra.mxu0 %v275
        %2350 = vmatprep.subr.mxu0 0.0
        %2351 = vmatpush2.msra.mxu0 %v270
        %2352 = vmatprep.subr.mxu0 0.0
        %2353 = vmatpush2.msra.mxu0 %v265
        %2354 = vmatprep.mubr.f32.mxu0 %v1240
        %2355 = vmatmul.mubr.f32.gmra.mxu0 %v1232
        %v2356 = vpop.f32.mrf.mxu0
        %v2357 = vadd.f32 0.0, %v2356
        %v2358 = vpop.f32.mrf.mxu0
        %2359 = vdwg.mxu0
        %2360 = vmatprep.subr.mxu0 0.0
        %2361 = vmatpush1.msra.mxu0 %v420
        %2362 = vmatprep.subr.mxu0 0.0
        %2363 = vmatpush1.msra.mxu0 %v415
        %2364 = vmatprep.subr.mxu0 0.0
        %2365 = vmatpush1.msra.mxu0 %v410
        %2366 = vmatprep.subr.mxu0 0.0
        %2367 = vmatpush1.msra.mxu0 %v405
        %2368 = vmatprep.subr.mxu0 0.0
        %2369 = vmatpush1.msra.mxu0 %v400
        %2370 = vmatprep.subr.mxu0 0.0
        %2371 = vmatpush1.msra.mxu0 %v395
        %2372 = vmatprep.subr.mxu0 0.0
        %2373 = vmatpush1.msra.mxu0 %v390
        %2374 = vmatprep.subr.mxu0 0.0
        %2375 = vmatpush1.msra.mxu0 %v385
        %2376 = vmatprep.subr.mxu0 0.0
        %2377 = vmatpush1.msra.mxu0 %v380
        %2378 = vmatprep.subr.mxu0 0.0
        %2379 = vmatpush1.msra.mxu0 %v375
        %2380 = vmatprep.subr.mxu0 0.0
        %2381 = vmatpush1.msra.mxu0 %v370
        %2382 = vmatprep.subr.mxu0 0.0
        %2383 = vmatpush1.msra.mxu0 %v365
        %2384 = vmatprep.subr.mxu0 0.0
        %2385 = vmatpush1.msra.mxu0 %v360
        %2386 = vmatprep.subr.mxu0 0.0
        %2387 = vmatpush1.msra.mxu0 %v355
        %2388 = vmatprep.subr.mxu0 0.0
        %2389 = vmatpush1.msra.mxu0 %v350
        %2390 = vmatprep.subr.mxu0 0.0
        %2391 = vmatpush1.msra.mxu0 %v345
        %2392 = vmatprep.subr.mxu0 0.0
        %2393 = vmatpush2.msra.mxu0 %v500
        %2394 = vmatprep.subr.mxu0 0.0
        %2395 = vmatpush2.msra.mxu0 %v495
        %2396 = vmatprep.subr.mxu0 0.0
        %2397 = vmatpush2.msra.mxu0 %v490
        %2398 = vmatprep.subr.mxu0 0.0
        %2399 = vmatpush2.msra.mxu0 %v485
        %2400 = vmatprep.subr.mxu0 0.0
        %2401 = vmatpush2.msra.mxu0 %v480
        %2402 = vmatprep.subr.mxu0 0.0
        %2403 = vmatpush2.msra.mxu0 %v475
        %2404 = vmatprep.subr.mxu0 0.0
        %2405 = vmatpush2.msra.mxu0 %v470
        %2406 = vmatprep.subr.mxu0 0.0
        %2407 = vmatpush2.msra.mxu0 %v465
        %2408 = vmatprep.subr.mxu0 0.0
        %2409 = vmatpush2.msra.mxu0 %v460
        %2410 = vmatprep.subr.mxu0 0.0
        %2411 = vmatpush2.msra.mxu0 %v455
        %2412 = vmatprep.subr.mxu0 0.0
        %2413 = vmatpush2.msra.mxu0 %v450
        %2414 = vmatprep.subr.mxu0 0.0
        %2415 = vmatpush2.msra.mxu0 %v445
        %2416 = vmatprep.subr.mxu0 0.0
        %2417 = vmatpush2.msra.mxu0 %v440
        %2418 = vmatprep.subr.mxu0 0.0
        %2419 = vmatpush2.msra.mxu0 %v435
        %2420 = vmatprep.subr.mxu0 0.0
        %2421 = vmatpush2.msra.mxu0 %v430
        %2422 = vmatprep.subr.mxu0 0.0
        %2423 = vmatpush2.msra.mxu0 %v425
        %2424 = vmatprep.mubr.f32.mxu0 %v1241
        %2425 = vmatmul.mubr.f32.gmra.mxu0 %v1239
        %v2426 = vpop.f32.mrf.mxu0
        %v2427 = vadd.f32 %v2357, %v2426
        %v2428 = vpop.f32.mrf.mxu0
        %2429 = vdwg.mxu0
        %2430 = vmatprep.subr.mxu0 0.0
        %2431 = vmatpush1.msra.mxu0 %v580
        %2432 = vmatprep.subr.mxu0 0.0
        %2433 = vmatpush1.msra.mxu0 %v575
        %2434 = vmatprep.subr.mxu0 0.0
        %2435 = vmatpush1.msra.mxu0 %v570
        %2436 = vmatprep.subr.mxu0 0.0
        %2437 = vmatpush1.msra.mxu0 %v565
        %2438 = vmatprep.subr.mxu0 0.0
        %2439 = vmatpush1.msra.mxu0 %v560
        %2440 = vmatprep.subr.mxu0 0.0
        %2441 = vmatpush1.msra.mxu0 %v555
        %2442 = vmatprep.subr.mxu0 0.0
        %2443 = vmatpush1.msra.mxu0 %v550
        %2444 = vmatprep.subr.mxu0 0.0
        %2445 = vmatpush1.msra.mxu0 %v545
        %2446 = vmatprep.subr.mxu0 0.0
        %2447 = vmatpush1.msra.mxu0 %v540
        %2448 = vmatprep.subr.mxu0 0.0
        %2449 = vmatpush1.msra.mxu0 %v535
        %2450 = vmatprep.subr.mxu0 0.0
        %2451 = vmatpush1.msra.mxu0 %v530
        %2452 = vmatprep.subr.mxu0 0.0
        %2453 = vmatpush1.msra.mxu0 %v525
        %2454 = vmatprep.subr.mxu0 0.0
        %2455 = vmatpush1.msra.mxu0 %v520
        %2456 = vmatprep.subr.mxu0 0.0
        %2457 = vmatpush1.msra.mxu0 %v515
        %2458 = vmatprep.subr.mxu0 0.0
        %2459 = vmatpush1.msra.mxu0 %v510
        %2460 = vmatprep.subr.mxu0 0.0
        %2461 = vmatpush1.msra.mxu0 %v505
        %2462 = vmatprep.subr.mxu0 0.0
        %2463 = vmatpush2.msra.mxu0 %v660
        %2464 = vmatprep.subr.mxu0 0.0
        %2465 = vmatpush2.msra.mxu0 %v655
        %2466 = vmatprep.subr.mxu0 0.0
        %2467 = vmatpush2.msra.mxu0 %v650
        %2468 = vmatprep.subr.mxu0 0.0
        %2469 = vmatpush2.msra.mxu0 %v645
        %2470 = vmatprep.subr.mxu0 0.0
        %2471 = vmatpush2.msra.mxu0 %v640
        %2472 = vmatprep.subr.mxu0 0.0
        %2473 = vmatpush2.msra.mxu0 %v635
        %2474 = vmatprep.subr.mxu0 0.0
        %2475 = vmatpush2.msra.mxu0 %v630
        %2476 = vmatprep.subr.mxu0 0.0
        %2477 = vmatpush2.msra.mxu0 %v625
        %2478 = vmatprep.subr.mxu0 0.0
        %2479 = vmatpush2.msra.mxu0 %v620
        %2480 = vmatprep.subr.mxu0 0.0
        %2481 = vmatpush2.msra.mxu0 %v615
        %2482 = vmatprep.subr.mxu0 0.0
        %2483 = vmatpush2.msra.mxu0 %v610
        %2484 = vmatprep.subr.mxu0 0.0
        %2485 = vmatpush2.msra.mxu0 %v605
        %2486 = vmatprep.subr.mxu0 0.0
        %2487 = vmatpush2.msra.mxu0 %v600
        %2488 = vmatprep.subr.mxu0 0.0
        %2489 = vmatpush2.msra.mxu0 %v595
        %2490 = vmatprep.subr.mxu0 0.0
        %2491 = vmatpush2.msra.mxu0 %v590
        %2492 = vmatprep.subr.mxu0 0.0
        %2493 = vmatpush2.msra.mxu0 %v585
        %2494 = vmatprep.mubr.f32.mxu0 %v1257
        %2495 = vmatmul.mubr.f32.gmra.mxu0 %v1249
        %v2496 = vpop.f32.mrf.mxu0
        %v2497 = vadd.f32 %v2427, %v2496
        %v2498 = vpop.f32.mrf.mxu0
        %2499 = vdwg.mxu0
        %2500 = vmatprep.subr.mxu0 0.0
        %2501 = vmatpush1.msra.mxu0 %v740
        %2502 = vmatprep.subr.mxu0 0.0
        %2503 = vmatpush1.msra.mxu0 %v735
        %2504 = vmatprep.subr.mxu0 0.0
        %2505 = vmatpush1.msra.mxu0 %v730
        %2506 = vmatprep.subr.mxu0 0.0
        %2507 = vmatpush1.msra.mxu0 %v725
        %2508 = vmatprep.subr.mxu0 0.0
        %2509 = vmatpush1.msra.mxu0 %v720
        %2510 = vmatprep.subr.mxu0 0.0
        %2511 = vmatpush1.msra.mxu0 %v715
        %2512 = vmatprep.subr.mxu0 0.0
        %2513 = vmatpush1.msra.mxu0 %v710
        %2514 = vmatprep.subr.mxu0 0.0
        %2515 = vmatpush1.msra.mxu0 %v705
        %2516 = vmatprep.subr.mxu0 0.0
        %2517 = vmatpush1.msra.mxu0 %v700
        %2518 = vmatprep.subr.mxu0 0.0
        %2519 = vmatpush1.msra.mxu0 %v695
        %2520 = vmatprep.subr.mxu0 0.0
        %2521 = vmatpush1.msra.mxu0 %v690
        %2522 = vmatprep.subr.mxu0 0.0
        %2523 = vmatpush1.msra.mxu0 %v685
        %2524 = vmatprep.subr.mxu0 0.0
        %2525 = vmatpush1.msra.mxu0 %v680
        %2526 = vmatprep.subr.mxu0 0.0
        %2527 = vmatpush1.msra.mxu0 %v675
        %2528 = vmatprep.subr.mxu0 0.0
        %2529 = vmatpush1.msra.mxu0 %v670
        %2530 = vmatprep.subr.mxu0 0.0
        %2531 = vmatpush1.msra.mxu0 %v665
        %2532 = vmatprep.subr.mxu0 0.0
        %2533 = vmatpush2.msra.mxu0 %v820
        %2534 = vmatprep.subr.mxu0 0.0
        %2535 = vmatpush2.msra.mxu0 %v815
        %2536 = vmatprep.subr.mxu0 0.0
        %2537 = vmatpush2.msra.mxu0 %v810
        %2538 = vmatprep.subr.mxu0 0.0
        %2539 = vmatpush2.msra.mxu0 %v805
        %2540 = vmatprep.subr.mxu0 0.0
        %2541 = vmatpush2.msra.mxu0 %v800
        %2542 = vmatprep.subr.mxu0 0.0
        %2543 = vmatpush2.msra.mxu0 %v795
        %2544 = vmatprep.subr.mxu0 0.0
        %2545 = vmatpush2.msra.mxu0 %v790
        %2546 = vmatprep.subr.mxu0 0.0
        %2547 = vmatpush2.msra.mxu0 %v785
        %2548 = vmatprep.subr.mxu0 0.0
        %2549 = vmatpush2.msra.mxu0 %v780
        %2550 = vmatprep.subr.mxu0 0.0
        %2551 = vmatpush2.msra.mxu0 %v775
        %2552 = vmatprep.subr.mxu0 0.0
        %2553 = vmatpush2.msra.mxu0 %v770
        %2554 = vmatprep.subr.mxu0 0.0
        %2555 = vmatpush2.msra.mxu0 %v765
        %2556 = vmatprep.subr.mxu0 0.0
        %2557 = vmatpush2.msra.mxu0 %v760
        %2558 = vmatprep.subr.mxu0 0.0
        %2559 = vmatpush2.msra.mxu0 %v755
        %2560 = vmatprep.subr.mxu0 0.0
        %2561 = vmatpush2.msra.mxu0 %v750
        %2562 = vmatprep.subr.mxu0 0.0
        %2563 = vmatpush2.msra.mxu0 %v745
        %2564 = vmatprep.mubr.f32.mxu0 %v1258
        %2565 = vmatmul.mubr.f32.gmra.mxu0 %v1256
        %v2566 = vpop.f32.mrf.mxu0
        %v2567 = vadd.f32 %v2497, %v2566
        %v2568 = vpop.f32.mrf.mxu0
        %2569 = vdwg.mxu0
        %2570 = vmatprep.subr.mxu0 0.0
        %2571 = vmatpush1.msra.mxu0 %v900
        %2572 = vmatprep.subr.mxu0 0.0
        %2573 = vmatpush1.msra.mxu0 %v895
        %2574 = vmatprep.subr.mxu0 0.0
        %2575 = vmatpush1.msra.mxu0 %v890
        %2576 = vmatprep.subr.mxu0 0.0
        %2577 = vmatpush1.msra.mxu0 %v885
        %2578 = vmatprep.subr.mxu0 0.0
        %2579 = vmatpush1.msra.mxu0 %v880
        %2580 = vmatprep.subr.mxu0 0.0
        %2581 = vmatpush1.msra.mxu0 %v875
        %2582 = vmatprep.subr.mxu0 0.0
        %2583 = vmatpush1.msra.mxu0 %v870
        %2584 = vmatprep.subr.mxu0 0.0
        %2585 = vmatpush1.msra.mxu0 %v865
        %2586 = vmatprep.subr.mxu0 0.0
        %2587 = vmatpush1.msra.mxu0 %v860
        %2588 = vmatprep.subr.mxu0 0.0
        %2589 = vmatpush1.msra.mxu0 %v855
        %2590 = vmatprep.subr.mxu0 0.0
        %2591 = vmatpush1.msra.mxu0 %v850
        %2592 = vmatprep.subr.mxu0 0.0
        %2593 = vmatpush1.msra.mxu0 %v845
        %2594 = vmatprep.subr.mxu0 0.0
        %2595 = vmatpush1.msra.mxu0 %v840
        %2596 = vmatprep.subr.mxu0 0.0
        %2597 = vmatpush1.msra.mxu0 %v835
        %2598 = vmatprep.subr.mxu0 0.0
        %2599 = vmatpush1.msra.mxu0 %v830
        %2600 = vmatprep.subr.mxu0 0.0
        %2601 = vmatpush1.msra.mxu0 %v825
        %2602 = vmatprep.subr.mxu0 0.0
        %2603 = vmatpush2.msra.mxu0 %v980
        %2604 = vmatprep.subr.mxu0 0.0
        %2605 = vmatpush2.msra.mxu0 %v975
        %2606 = vmatprep.subr.mxu0 0.0
        %2607 = vmatpush2.msra.mxu0 %v970
        %2608 = vmatprep.subr.mxu0 0.0
        %2609 = vmatpush2.msra.mxu0 %v965
        %2610 = vmatprep.subr.mxu0 0.0
        %2611 = vmatpush2.msra.mxu0 %v960
        %2612 = vmatprep.subr.mxu0 0.0
        %2613 = vmatpush2.msra.mxu0 %v955
        %2614 = vmatprep.subr.mxu0 0.0
        %2615 = vmatpush2.msra.mxu0 %v950
        %2616 = vmatprep.subr.mxu0 0.0
        %2617 = vmatpush2.msra.mxu0 %v945
        %2618 = vmatprep.subr.mxu0 0.0
        %2619 = vmatpush2.msra.mxu0 %v940
        %2620 = vmatprep.subr.mxu0 0.0
        %2621 = vmatpush2.msra.mxu0 %v935
        %2622 = vmatprep.subr.mxu0 0.0
        %2623 = vmatpush2.msra.mxu0 %v930
        %2624 = vmatprep.subr.mxu0 0.0
        %2625 = vmatpush2.msra.mxu0 %v925
        %2626 = vmatprep.subr.mxu0 0.0
        %2627 = vmatpush2.msra.mxu0 %v920
        %2628 = vmatprep.subr.mxu0 0.0
        %2629 = vmatpush2.msra.mxu0 %v915
        %2630 = vmatprep.subr.mxu0 0.0
        %2631 = vmatpush2.msra.mxu0 %v910
        %2632 = vmatprep.subr.mxu0 0.0
        %2633 = vmatpush2.msra.mxu0 %v905
        %2634 = vmatprep.mubr.f32.mxu0 %v1274
        %2635 = vmatmul.mubr.f32.gmra.mxu0 %v1266
        %v2636 = vpop.f32.mrf.mxu0
        %v2637 = vadd.f32 %v2567, %v2636
        %v2638 = vpop.f32.mrf.mxu0
        %2639 = vdwg.mxu0
        %2640 = vmatprep.subr.mxu0 0.0
        %2641 = vmatpush1.msra.mxu0 %v1060
        %2642 = vmatprep.subr.mxu0 0.0
        %2643 = vmatpush1.msra.mxu0 %v1055
        %2644 = vmatprep.subr.mxu0 0.0
        %2645 = vmatpush1.msra.mxu0 %v1050
        %2646 = vmatprep.subr.mxu0 0.0
        %2647 = vmatpush1.msra.mxu0 %v1045
        %2648 = vmatprep.subr.mxu0 0.0
        %2649 = vmatpush1.msra.mxu0 %v1040
        %2650 = vmatprep.subr.mxu0 0.0
        %2651 = vmatpush1.msra.mxu0 %v1035
        %2652 = vmatprep.subr.mxu0 0.0
        %2653 = vmatpush1.msra.mxu0 %v1030
        %2654 = vmatprep.subr.mxu0 0.0
        %2655 = vmatpush1.msra.mxu0 %v1025
        %2656 = vmatprep.subr.mxu0 0.0
        %2657 = vmatpush1.msra.mxu0 %v1020
        %2658 = vmatprep.subr.mxu0 0.0
        %2659 = vmatpush1.msra.mxu0 %v1015
        %2660 = vmatprep.subr.mxu0 0.0
        %2661 = vmatpush1.msra.mxu0 %v1010
        %2662 = vmatprep.subr.mxu0 0.0
        %2663 = vmatpush1.msra.mxu0 %v1005
        %2664 = vmatprep.subr.mxu0 0.0
        %2665 = vmatpush1.msra.mxu0 %v1000
        %2666 = vmatprep.subr.mxu0 0.0
        %2667 = vmatpush1.msra.mxu0 %v995
        %2668 = vmatprep.subr.mxu0 0.0
        %2669 = vmatpush1.msra.mxu0 %v990
        %2670 = vmatprep.subr.mxu0 0.0
        %2671 = vmatpush1.msra.mxu0 %v985
        %2672 = vmatprep.subr.mxu0 0.0
        %2673 = vmatpush2.msra.mxu0 %v1140
        %2674 = vmatprep.subr.mxu0 0.0
        %2675 = vmatpush2.msra.mxu0 %v1135
        %2676 = vmatprep.subr.mxu0 0.0
        %2677 = vmatpush2.msra.mxu0 %v1130
        %2678 = vmatprep.subr.mxu0 0.0
        %2679 = vmatpush2.msra.mxu0 %v1125
        %2680 = vmatprep.subr.mxu0 0.0
        %2681 = vmatpush2.msra.mxu0 %v1120
        %2682 = vmatprep.subr.mxu0 0.0
        %2683 = vmatpush2.msra.mxu0 %v1115
        %2684 = vmatprep.subr.mxu0 0.0
        %2685 = vmatpush2.msra.mxu0 %v1110
        %2686 = vmatprep.subr.mxu0 0.0
        %2687 = vmatpush2.msra.mxu0 %v1105
        %2688 = vmatprep.subr.mxu0 0.0
        %2689 = vmatpush2.msra.mxu0 %v1100
        %2690 = vmatprep.subr.mxu0 0.0
        %2691 = vmatpush2.msra.mxu0 %v1095
        %2692 = vmatprep.subr.mxu0 0.0
        %2693 = vmatpush2.msra.mxu0 %v1090
        %2694 = vmatprep.subr.mxu0 0.0
        %2695 = vmatpush2.msra.mxu0 %v1085
        %2696 = vmatprep.subr.mxu0 0.0
        %2697 = vmatpush2.msra.mxu0 %v1080
        %2698 = vmatprep.subr.mxu0 0.0
        %2699 = vmatpush2.msra.mxu0 %v1075
        %2700 = vmatprep.subr.mxu0 0.0
        %2701 = vmatpush2.msra.mxu0 %v1070
        %2702 = vmatprep.subr.mxu0 0.0
        %2703 = vmatpush2.msra.mxu0 %v1065
        %2704 = vmatprep.mubr.f32.mxu0 %v1275
        %2705 = vmatmul.mubr.f32.gmra.mxu0 %v1273
        %v2706 = vpop.f32.mrf.mxu0
        %v2707 = vadd.f32 %v2637, %v2706
        %v2708 = vpop.f32.mrf.mxu0
        %2709 = vdwg.mxu0
        %2710 = vmatprep.subr.mxu0 0.0
        %2711 = vmatpush1.msra.mxu0 %v1220
        %2712 = vmatprep.subr.mxu0 0.0
        %2713 = vmatpush1.msra.mxu0 %v1215
        %2714 = vmatprep.subr.mxu0 0.0
        %2715 = vmatpush1.msra.mxu0 %v1210
        %2716 = vmatprep.subr.mxu0 0.0
        %2717 = vmatpush1.msra.mxu0 %v1205
        %2718 = vmatprep.subr.mxu0 0.0
        %2719 = vmatpush1.msra.mxu0 %v1200
        %2720 = vmatprep.subr.mxu0 0.0
        %2721 = vmatpush1.msra.mxu0 %v1195
        %2722 = vmatprep.subr.mxu0 0.0
        %2723 = vmatpush1.msra.mxu0 %v1190
        %2724 = vmatprep.subr.mxu0 0.0
        %2725 = vmatpush1.msra.mxu0 %v1185
        %2726 = vmatprep.subr.mxu0 0.0
        %2727 = vmatpush1.msra.mxu0 %v1180
        %2728 = vmatprep.subr.mxu0 0.0
        %2729 = vmatpush1.msra.mxu0 %v1175
        %2730 = vmatprep.subr.mxu0 0.0
        %2731 = vmatpush1.msra.mxu0 %v1170
        %2732 = vmatprep.subr.mxu0 0.0
        %2733 = vmatpush1.msra.mxu0 %v1165
        %2734 = vmatprep.subr.mxu0 0.0
        %2735 = vmatpush1.msra.mxu0 %v1160
        %2736 = vmatprep.subr.mxu0 0.0
        %2737 = vmatpush1.msra.mxu0 %v1155
        %2738 = vmatprep.subr.mxu0 0.0
        %2739 = vmatpush1.msra.mxu0 %v1150
        %2740 = vmatprep.subr.mxu0 0.0
        %2741 = vmatpush1.msra.mxu0 %v1145
        %2742 = vmatprep.subr.mxu0 0.0
        %2743 = vmatpush2.msra.mxu0 0.0
        %2744 = vmatprep.subr.mxu0 0.0
        %2745 = vmatpush2.msra.mxu0 0.0
        %2746 = vmatprep.subr.mxu0 0.0
        %2747 = vmatpush2.msra.mxu0 0.0
        %2748 = vmatprep.subr.mxu0 0.0
        %2749 = vmatpush2.msra.mxu0 0.0
        %2750 = vmatprep.subr.mxu0 0.0
        %2751 = vmatpush2.msra.mxu0 0.0
        %2752 = vmatprep.subr.mxu0 0.0
        %2753 = vmatpush2.msra.mxu0 0.0
        %2754 = vmatprep.subr.mxu0 0.0
        %2755 = vmatpush2.msra.mxu0 0.0
        %2756 = vmatprep.subr.mxu0 0.0
        %2757 = vmatpush2.msra.mxu0 0.0
        %2758 = vmatprep.subr.mxu0 0.0
        %2759 = vmatpush2.msra.mxu0 0.0
        %2760 = vmatprep.subr.mxu0 0.0
        %2761 = vmatpush2.msra.mxu0 0.0
        %2762 = vmatprep.subr.mxu0 0.0
        %2763 = vmatpush2.msra.mxu0 0.0
        %2764 = vmatprep.subr.mxu0 0.0
        %2765 = vmatpush2.msra.mxu0 0.0
        %2766 = vmatprep.subr.mxu0 0.0
        %2767 = vmatpush2.msra.mxu0 0.0
        %2768 = vmatprep.subr.mxu0 0.0
        %2769 = vmatpush2.msra.mxu0 0.0
        %2770 = vmatprep.subr.mxu0 0.0
        %2771 = vmatpush2.msra.mxu0 0.0
        %2772 = vmatprep.subr.mxu0 0.0
        %2773 = vmatpush2.msra.mxu0 0.0
        %2774 = vmatprep.mubr.f32.mxu0 0.0
        %2775 = vmatmul.mubr.f32.gmra.mxu0 %v1282
        %v2776 = vpop.f32.mrf.mxu0
        %v2777 = vadd.f32 %v2707, %v2776
        %v2778 = vpop.f32.mrf.mxu0
        %2779 = vdwg.mxu0
        %v2785 = vcombine.low %v1789, %v1791
        %v2786 = vcombine.low %v2286, %v2288
        %v2788 = vunpack.c.l.s4 1983009808
        %v2789 = vunpack.c.0.s8 %v2788
        %v2790 = vlaneseq
        %v2791 = vshrl.u32 %v2790, 7
        %v2792 = vsub.s32 %v2789, %v2791
        %v2793 = vrot.slane %v2785, %v2792
        %v2795 = vunpack.c.l.s4 1983009808
        %v2796 = vunpack.c.0.s8 %v2795
        %v2797 = vlaneseq
        %v2798 = vshrl.u32 %v2797, 7
        %v2799 = vsub.s32 %v2796, %v2798
        %v2800 = vrot.slane %v2786, %v2799
        %v2801 = vcombine.low %v2793, %v2800
        %v2803 = vunpack.c.l.s4 1983009808
        %v2804 = vunpack.c.0.s8 %v2803
        %v2805 = vlaneseq
        %v2806 = vshrl.u32 %v2805, 7
        %v2807 = vsub.s32 %v2804, %v2806
        %v2808 = vrot.slane %v2777, %v2807
        %2811 = vst [vmem:[%s174] sm:$0xff] %v2801
        %2812 = vst [vmem:[%s174 + $0x8] sm:$0x3] %v2808
        %s2813 = sand.u32 %s75, 1
        %s2814 = scalar_lea.sflag [#allocation4], %s2813
        %s2815 = sand.u32 %s75, 1
        %s2816 = smul.addr %s2815, 10
        %s2817 = scalar_lea.vmem [#allocation7], %s2816
        // Predicated region
        $region37: #{tpu_custom_call.1} parent=27 // pred_check
          %p2818 = pneg %p85
        $region38: #{tpu_custom_call.1} parent=27 // pred_check_branch
          %2820 = sbr.rel (%p2818) target = $region40
        $region39: #{tpu_custom_call.1} parent=27 // pred_region
          %s2821 = smul.u32 5, %s20
          %s2823 = ssub.s32 160, 160
          %2824 = vsyncadd %s2814, %s2823
          %s2825 = smul.addr %s2821, 32
          %s2826 = scalar_lea.hbm %s2, %s2825
          %s2828 = sshll.u32 %s2817, 4
          %s2829 = int_to_ptr.vmem [resolvable:$true] %s2828
          %2831 = dma.vmem_to_hbm [thread:$0]  %s2829, 160, %s2826, %s2814
        $region40: #{tpu_custom_call.1} parent=27 // pred_fallthru
          _
      $region28: #{tpu_custom_call.1} parent=5 // pred_fallthru
        _
      %p2832 = scmp.le.s32.totalorder 2, %s15
      // Predicated region
      $region41: #{tpu_custom_call.1} parent=5 // pred_check
        %p2833 = pneg %p2832
      $region42: #{tpu_custom_call.1} parent=5 // pred_check_branch
        %2835 = sbr.rel (%p2833) target = $region44
      $region43: #{tpu_custom_call.1} parent=5 // pred_region
        %s2836 = ssub.s32 %s15, 2
        // Predicated region
        $region45: #{tpu_custom_call.1} parent=43 // pred_check
          %p2837 = pneg %p91
        $region46: #{tpu_custom_call.1} parent=43 // pred_check_branch
          %2839 = sbr.rel (%p2837) target = $region48
        $region47: #{tpu_custom_call.1} parent=43 // pred_region
          %s2840 = sand.u32 %s76, 1
          %s2841 = scalar_lea.sflag [#allocation4], %s2840
          %s2842 = sand.u32 %s76, 1
          %s2843 = smul.addr %s2842, 10
          %s2844 = scalar_lea.vmem [#allocation7], %s2843
          %2845 = dma.done %s2841, 160
        $region48: #{tpu_custom_call.1} parent=43 // pred_fallthru
          _
      $region44: #{tpu_custom_call.1} parent=5 // pred_fallthru
        _
    $region6: #{tpu_custom_call.1} parent=1 // loop_footer
      %s19 = sadd.s32 1, %s15
    $region7: #{tpu_custom_call.1} parent=1 // loop_footer_branch
      %14 = sbr.rel target = $region3
    $region8: #{tpu_custom_call.1} parent=1 // loop_exit
      _
    %2846 = vsyncpa [#allocation3], 1
    %s2847 = scalar_lea.sflag [#allocation3], 1
    %2848 = vsyncpa %s2847, 1
    %2849 = vsyncpa [#allocation6], 1
    %s2850 = scalar_lea.sflag [#allocation6], 1
    %2851 = vsyncpa %s2850, 1
    %2852 = vsyncpa [#allocation4], 1
    %s2853 = scalar_lea.sflag [#allocation4], 1
    %2854 = vsyncpa %s2853, 1

</llo_original>
